<compile_context>
chip_gen: v6e
topology: v6e:2x2x1
jax: 0.10.0
libtpu: 0.0.40
codegen_flags: <defaults>
</compile_context>

<pallas_src>
import functools

import jax
import jax.numpy as jnp
from jax import lax
from jax.experimental import pallas as pl
from jax.experimental.pallas import tpu as pltpu


# --------------------------------------------------------------------------
# Fused Pallas kernel: QKV projection + attention + output projection (+bias)
# --------------------------------------------------------------------------
def _bdot(lhs, rhs, lhs_c, rhs_c):
    """Head-batched matmul (batch axis 0 on both operands), f32 accumulation."""
    return lax.dot_general(
        lhs,
        rhs,
        dimension_numbers=(((lhs_c,), (rhs_c,)), ((0,), (0,))),
        preferred_element_type=jnp.float32,
    )


def fused_attention_kernel(x_ref, wq_ref, wk_ref, wv_ref, wo_ref, bo_ref, o_ref, *, heads):
    # x_ref : (1, n, dim)        f32   one batch element
    # wq/wk/wv_ref : (h, dim, d) bf16  (softmax scale pre-folded into wq)
    # wo_ref: (h, d, dim)        bf16
    # bo_ref: (1, dim)           f32
    # o_ref : (1, n, dim)        f32
    n, dim = x_ref.shape[1], x_ref.shape[2]

    x = x_ref[0].astype(jnp.bfloat16)                       # (n, dim)
    xb = jnp.broadcast_to(x[None, :, :], (heads, n, dim))   # (h, n, dim)

    # QKV projections, head-batched on the MXU -> (h, n, d), f32 accumulators.
    q = _bdot(xb, wq_ref[...], 2, 1)
    k = _bdot(xb, wk_ref[...], 2, 1)
    v = _bdot(xb, wv_ref[...], 2, 1)

    # Scores: contract d of q with d of k directly (no explicit transpose). (h, n, n)
    dots = _bdot(q.astype(jnp.bfloat16), k.astype(jnp.bfloat16), 2, 2)

    # Numerically-stable softmax in f32; divide moved onto the EUP.
    m = jnp.max(dots, axis=-1, keepdims=True)
    e = jnp.exp(dots - m)
    denom = jnp.sum(e, axis=-1, keepdims=True)
    attn = e * pl.reciprocal(denom, approx=True)

    # attn @ v -> (h, n, d)
    out = _bdot(attn.astype(jnp.bfloat16), v.astype(jnp.bfloat16), 2, 1)

    # Output projection fused: y = sum_h out[h] @ W_out[h] + b_out  -> (n, dim).
    # Summing the head-batched results avoids any in-kernel (h,n,d)->(n,h*d) relayout.
    yh = _bdot(out.astype(jnp.bfloat16), wo_ref[...], 2, 1)          # (h, n, dim)
    y = jnp.sum(yh, axis=0) + bo_ref[...].astype(jnp.float32)        # (n, dim)

    o_ref[0] = y.astype(o_ref.dtype)


# --------------------------------------------------------------------------
# Forward wrapper (trace-time weight re-layout + one pallas_call)
# --------------------------------------------------------------------------
def standard_attention_forward(x, w_qkv, w_out, b_out, heads, dim_head):
    """
    x:     [b, n, dim]
    w_qkv: [dim, 3 * heads * dim_head]   (to_qkv.weight.T, no bias)
    w_out: [heads * dim_head, dim]       (to_out[0].weight.T)
    b_out: [dim]                         (to_out[0].bias)
    """
    b, n, dim = x.shape
    inner_dim = heads * dim_head
    scale = dim_head ** (-0.5)

    # ---- trace-time weight re-layout (weights only; no activation HBM traffic) ----
    w_q = w_qkv[:, :inner_dim]
    w_k = w_qkv[:, inner_dim:2 * inner_dim]
    w_v = w_qkv[:, 2 * inner_dim:]

    def per_head(w):  # (dim, heads*d) -> (heads, dim, d)
        return jnp.transpose(w.reshape(dim, heads, dim_head), (1, 0, 2))

    wq3 = (per_head(w_q) * scale).astype(jnp.bfloat16)   # fold 1/sqrt(d) into Q weights
    wk3 = per_head(w_k).astype(jnp.bfloat16)
    wv3 = per_head(w_v).astype(jnp.bfloat16)
    wo3 = w_out.reshape(heads, dim_head, dim).astype(jnp.bfloat16)
    bo = b_out.reshape(1, dim).astype(jnp.float32)

    kern = functools.partial(fused_attention_kernel, heads=heads)

    def full_spec(shape):
        ndims = len(shape)
        return pl.BlockSpec(shape, lambda i: (0,) * ndims)

    return pl.pallas_call(
        kern,
        out_shape=jax.ShapeDtypeStruct((b, n, dim), x.dtype),
        grid=(b,),
        in_specs=[
            pl.BlockSpec((1, n, dim), lambda i: (i, 0, 0)),
            full_spec((heads, dim, dim_head)),
            full_spec((heads, dim, dim_head)),
            full_spec((heads, dim, dim_head)),
            full_spec((heads, dim_head, dim)),
            full_spec((1, dim)),
        ],
        out_specs=pl.BlockSpec((1, n, dim), lambda i: (i, 0, 0)),
        compiler_params=pltpu.CompilerParams(
            dimension_semantics=("parallel",),
        ),
    )(x, wq3, wk3, wv3, wo3, bo)


# --------------------------------------------------------------------------
# Pure-JAX f32 reference for sanity checking.
# --------------------------------------------------------------------------
def reference_forward(x, w_qkv, w_out, b_out, heads, dim_head):
    b, n, dim = x.shape
    scale = dim_head ** (-0.5)
    qkv = x @ w_qkv
    qkv = qkv.reshape(b, n, 3, heads, dim_head)
    qkv = jnp.transpose(qkv, (2, 0, 3, 1, 4))
    q, k, v = qkv[0], qkv[1], qkv[2]
    dots = jnp.einsum("bhqd,bhkd->bhqk", q, k) * scale
    attn = jax.nn.softmax(dots, axis=-1)
    out = jnp.einsum("bhqk,bhkd->bhqd", attn, v)
    out = jnp.transpose(out, (0, 2, 1, 3)).reshape(b, n, heads * dim_head)
    return out @ w_out + b_out


if __name__ == "__main__":
    # Module hyper-parameters (StandardAttention defaults, small dim).
    dim, heads, dim_head = 32, 8, 64
    inner_dim = heads * dim_head

    # Small example input: batch=2, seq=8.
    b, n = 2, 8

    key = jax.random.PRNGKey(0)
    k_x, k_qkv, k_out, k_bias = jax.random.split(key, 4)

    x = jax.random.normal(k_x, (b, n, dim), dtype=jnp.float32)

    def xavier_uniform(key, shape):
        fan_in, fan_out = shape
        limit = (6.0 / (fan_in + fan_out)) ** 0.5
        return jax.random.uniform(key, shape, jnp.float32, -limit, limit)

    w_qkv = xavier_uniform(k_qkv, (dim, inner_dim * 3))     # to_qkv.weight.T
    w_out = xavier_uniform(k_out, (inner_dim, dim))         # to_out[0].weight.T
    # to_out[0] is nn.Linear(inner_dim, dim) with bias=True -> non-zero bias here
    # so the in-kernel bias add is actually exercised.
    b_limit = inner_dim ** (-0.5)
    b_out = jax.random.uniform(k_bias, (dim,), jnp.float32, -b_limit, b_limit)

    fwd = jax.jit(
        lambda x_, wqkv_, wout_, bout_: standard_attention_forward(
            x_, wqkv_, wout_, bout_, heads, dim_head
        )
    )
    y = fwd(x, w_qkv, w_out, b_out)
    y = jax.block_until_ready(y)

    y_ref = reference_forward(x, w_qkv, w_out, b_out, heads, dim_head)
    assert y.shape == (b, n, dim)
    # bf16 MXU inputs + approx reciprocal -> slightly looser tolerance vs f32 ref.
    assert jnp.allclose(y, y_ref, atol=3e-2, rtol=3e-2), float(
        jnp.max(jnp.abs(y - y_ref))
    )

    print("KERNEL_OK")
</pallas_src>

<mosaic_0001>
module attributes {stable_mosaic.version = 11 : i64} {
  func.func @fused_attention_kernel(%arg0: i32, %arg1: memref<1x8x32xf32, #tpu.memory_space<vmem>>, %arg2: memref<8x32x64xbf16, #tpu.memory_space<vmem>>, %arg3: memref<8x32x64xbf16, #tpu.memory_space<vmem>>, %arg4: memref<8x32x64xbf16, #tpu.memory_space<vmem>>, %arg5: memref<8x64x32xbf16, #tpu.memory_space<vmem>>, %arg6: memref<1x32xf32, #tpu.memory_space<vmem>>, %arg7: memref<1x8x32xf32, #tpu.memory_space<vmem>>) attributes {dimension_semantics = [#tpu.dimension_semantics<parallel>], iteration_bounds = array<i64: 2>, scalar_prefetch = 0 : i64, scratch_operands = 0 : i64, tpu.core_type = #tpu.core_type<tc>, window_params = [{transform_indices = @transform_0, window_bounds = array<i64: 1, 8, 32>}, {pipeline_mode = #tpu.pipeline_mode<synchronous>, transform_indices = @transform_1, window_bounds = array<i64: 8, 32, 64>}, {pipeline_mode = #tpu.pipeline_mode<synchronous>, transform_indices = @transform_2, window_bounds = array<i64: 8, 32, 64>}, {pipeline_mode = #tpu.pipeline_mode<synchronous>, transform_indices = @transform_3, window_bounds = array<i64: 8, 32, 64>}, {pipeline_mode = #tpu.pipeline_mode<synchronous>, transform_indices = @transform_4, window_bounds = array<i64: 8, 64, 32>}, {pipeline_mode = #tpu.pipeline_mode<synchronous>, transform_indices = @transform_5, window_bounds = array<i64: 1, 32>}, {transform_indices = @transform_6, window_bounds = array<i64: 1, 8, 32>}]} {
    %c0 = arith.constant 0 : index
    %c0_0 = arith.constant 0 : index
    %c0_1 = arith.constant 0 : index
    %0 = vector.load %arg1[%c0, %c0_0, %c0_1] : memref<1x8x32xf32, #tpu.memory_space<vmem>>, vector<1x8x32xf32>
    %1 = vector.shape_cast %0 : vector<1x8x32xf32> to vector<8x32xf32>
    %2 = arith.truncf %1 : vector<8x32xf32> to vector<8x32xbf16>
    %3 = vector.shape_cast %2 : vector<8x32xbf16> to vector<1x8x32xbf16>
    %4 = vector.shape_cast %3 : vector<1x8x32xbf16> to vector<1x8x32xbf16>
    %5 = vector.broadcast %4 : vector<1x8x32xbf16> to vector<8x8x32xbf16>
    %c0_2 = arith.constant 0 : index
    %c0_3 = arith.constant 0 : index
    %c0_4 = arith.constant 0 : index
    %6 = vector.load %arg2[%c0_2, %c0_3, %c0_4] : memref<8x32x64xbf16, #tpu.memory_space<vmem>>, vector<8x32x64xbf16>
    %cst = arith.constant dense<0.000000e+00> : vector<8x8x64xf32>
    %7 = tpu.matmul %5, %6, %cst {dimension_numbers = #tpu.dot_dimension_numbers<[2], [1], [1], [2], [0, 0, 0, 1, 1, 2], [0], [0]>} : vector<8x8x32xbf16>, vector<8x32x64xbf16>, vector<8x8x64xf32> -> vector<8x8x64xf32>
    %c0_5 = arith.constant 0 : index
    %c0_6 = arith.constant 0 : index
    %c0_7 = arith.constant 0 : index
    %8 = vector.load %arg3[%c0_5, %c0_6, %c0_7] : memref<8x32x64xbf16, #tpu.memory_space<vmem>>, vector<8x32x64xbf16>
    %cst_8 = arith.constant dense<0.000000e+00> : vector<8x8x64xf32>
    %9 = tpu.matmul %5, %8, %cst_8 {dimension_numbers = #tpu.dot_dimension_numbers<[2], [1], [1], [2], [0, 0, 0, 1, 1, 2], [0], [0]>} : vector<8x8x32xbf16>, vector<8x32x64xbf16>, vector<8x8x64xf32> -> vector<8x8x64xf32>
    %c0_9 = arith.constant 0 : index
    %c0_10 = arith.constant 0 : index
    %c0_11 = arith.constant 0 : index
    %10 = vector.load %arg4[%c0_9, %c0_10, %c0_11] : memref<8x32x64xbf16, #tpu.memory_space<vmem>>, vector<8x32x64xbf16>
    %cst_12 = arith.constant dense<0.000000e+00> : vector<8x8x64xf32>
    %11 = tpu.matmul %5, %10, %cst_12 {dimension_numbers = #tpu.dot_dimension_numbers<[2], [1], [1], [2], [0, 0, 0, 1, 1, 2], [0], [0]>} : vector<8x8x32xbf16>, vector<8x32x64xbf16>, vector<8x8x64xf32> -> vector<8x8x64xf32>
    %12 = arith.truncf %7 : vector<8x8x64xf32> to vector<8x8x64xbf16>
    %13 = arith.truncf %9 : vector<8x8x64xf32> to vector<8x8x64xbf16>
    %cst_13 = arith.constant dense<0.000000e+00> : vector<8x8x8xf32>
    %14 = tpu.matmul %12, %13, %cst_13 {dimension_numbers = #tpu.dot_dimension_numbers<[2], [2], [1], [1], [0, 0, 0, 1, 1, 1], [0], [0]>} : vector<8x8x64xbf16>, vector<8x8x64xbf16>, vector<8x8x8xf32> -> vector<8x8x8xf32>
    %cst_14 = arith.constant dense<0xFF800000> : vector<8x8xf32>
    %15 = vector.multi_reduction <maximumf>, %14, %cst_14 [2] : vector<8x8x8xf32> to vector<8x8xf32>
    %16 = vector.shape_cast %15 : vector<8x8xf32> to vector<8x8x1xf32>
    %17 = vector.broadcast %16 : vector<8x8x1xf32> to vector<8x8x8xf32>
    %18 = arith.subf %14, %17 : vector<8x8x8xf32>
    %19 = math.exp %18 : vector<8x8x8xf32>
    %cst_15 = arith.constant dense<0.000000e+00> : vector<8x8xf32>
    %20 = vector.multi_reduction <add>, %19, %cst_15 [2] : vector<8x8x8xf32> to vector<8x8xf32>
    %21 = vector.shape_cast %20 : vector<8x8xf32> to vector<8x8x1xf32>
    %22 = tpu.reciprocal %21 {approx = true} : vector<8x8x1xf32> -> vector<8x8x1xf32>
    %23 = vector.broadcast %22 : vector<8x8x1xf32> to vector<8x8x8xf32>
    %24 = arith.mulf %19, %23 : vector<8x8x8xf32>
    %25 = arith.truncf %24 : vector<8x8x8xf32> to vector<8x8x8xbf16>
    %26 = arith.truncf %11 : vector<8x8x64xf32> to vector<8x8x64xbf16>
    %cst_16 = arith.constant dense<0.000000e+00> : vector<8x8x64xf32>
    %27 = tpu.matmul %25, %26, %cst_16 {dimension_numbers = #tpu.dot_dimension_numbers<[2], [1], [1], [2], [0, 0, 0, 1, 1, 2], [0], [0]>} : vector<8x8x8xbf16>, vector<8x8x64xbf16>, vector<8x8x64xf32> -> vector<8x8x64xf32>
    %28 = arith.truncf %27 : vector<8x8x64xf32> to vector<8x8x64xbf16>
    %c0_17 = arith.constant 0 : index
    %c0_18 = arith.constant 0 : index
    %c0_19 = arith.constant 0 : index
    %29 = vector.load %arg5[%c0_17, %c0_18, %c0_19] : memref<8x64x32xbf16, #tpu.memory_space<vmem>>, vector<8x64x32xbf16>
    %cst_20 = arith.constant dense<0.000000e+00> : vector<8x8x32xf32>
    %30 = tpu.matmul %28, %29, %cst_20 {dimension_numbers = #tpu.dot_dimension_numbers<[2], [1], [1], [2], [0, 0, 0, 1, 1, 2], [0], [0]>} : vector<8x8x64xbf16>, vector<8x64x32xbf16>, vector<8x8x32xf32> -> vector<8x8x32xf32>
    %cst_21 = arith.constant dense<0.000000e+00> : vector<8x32xf32>
    %31 = vector.multi_reduction <add>, %30, %cst_21 [0] : vector<8x8x32xf32> to vector<8x32xf32>
    %c0_22 = arith.constant 0 : index
    %c0_23 = arith.constant 0 : index
    %32 = vector.load %arg6[%c0_22, %c0_23] : memref<1x32xf32, #tpu.memory_space<vmem>>, vector<1x32xf32>
    %33 = vector.broadcast %32 : vector<1x32xf32> to vector<8x32xf32>
    %34 = arith.addf %31, %33 : vector<8x32xf32>
    %c0_24 = arith.constant 0 : index
    %c0_25 = arith.constant 0 : index
    %c0_26 = arith.constant 0 : index
    %35 = vector.load %arg7[%c0_24, %c0_25, %c0_26] : memref<1x8x32xf32, #tpu.memory_space<vmem>>, vector<1x8x32xf32>
    %36 = vector.shape_cast %35 : vector<1x8x32xf32> to vector<8x32xf32>
    %37 = vector.shape_cast %34 : vector<8x32xf32> to vector<1x8x32xf32>
    tpu.vector_store %arg7[%c0_24, %c0_25, %c0_26], %37 {strides = array<i32>} : memref<1x8x32xf32, #tpu.memory_space<vmem>>, vector<1x8x32xf32>,
    return
  }
  func.func @transform_0(%arg0: i32) -> (i32, i32, i32) {
    %c0_i32 = arith.constant 0 : i32
    %c0_i32_0 = arith.constant 0 : i32
    %c0_i32_1 = arith.constant 0 : i32
    return %arg0, %c0_i32, %c0_i32_0 : i32, i32, i32
  }
  func.func @transform_1(%arg0: i32) -> (i32, i32, i32) {
    %c0_i32 = arith.constant 0 : i32
    %c0_i32_0 = arith.constant 0 : i32
    %c0_i32_1 = arith.constant 0 : i32
    %c0_i32_2 = arith.constant 0 : i32
    return %c0_i32, %c0_i32_0, %c0_i32_1 : i32, i32, i32
  }
  func.func @transform_2(%arg0: i32) -> (i32, i32, i32) {
    %c0_i32 = arith.constant 0 : i32
    %c0_i32_0 = arith.constant 0 : i32
    %c0_i32_1 = arith.constant 0 : i32
    %c0_i32_2 = arith.constant 0 : i32
    return %c0_i32, %c0_i32_0, %c0_i32_1 : i32, i32, i32
  }
  func.func @transform_3(%arg0: i32) -> (i32, i32, i32) {
    %c0_i32 = arith.constant 0 : i32
    %c0_i32_0 = arith.constant 0 : i32
    %c0_i32_1 = arith.constant 0 : i32
    %c0_i32_2 = arith.constant 0 : i32
    return %c0_i32, %c0_i32_0, %c0_i32_1 : i32, i32, i32
  }
  func.func @transform_4(%arg0: i32) -> (i32, i32, i32) {
    %c0_i32 = arith.constant 0 : i32
    %c0_i32_0 = arith.constant 0 : i32
    %c0_i32_1 = arith.constant 0 : i32
    %c0_i32_2 = arith.constant 0 : i32
    return %c0_i32, %c0_i32_0, %c0_i32_1 : i32, i32, i32
  }
  func.func @transform_5(%arg0: i32) -> (i32, i32) {
    %c0_i32 = arith.constant 0 : i32
    %c0_i32_0 = arith.constant 0 : i32
    %c0_i32_1 = arith.constant 0 : i32
    return %c0_i32, %c0_i32_0 : i32, i32
  }
  func.func @transform_6(%arg0: i32) -> (i32, i32, i32) {
    %c0_i32 = arith.constant 0 : i32
    %c0_i32_0 = arith.constant 0 : i32
    %c0_i32_1 = arith.constant 0 : i32
    return %arg0, %c0_i32, %c0_i32_0 : i32, i32, i32
  }
}

</mosaic_0001>

<llo_original>
// kernel: _lambda_.1
$region0: #{_lambda_.1}
  #allocation0 [shape = 'u32[]', space=smem, size = 0x4, offset = 0x4, fixed_abs, tag = 'smem constant byte address 0x4 - core index']
  #allocation1 [shape = 'u32[144,128]{1,0:T(1,128)}', space=vmem, size = 0x12000, scoped, tag = 'internal scratch']
  %s0 = inlined_call_operand.vmem [shape: f32[2,8,32], index: 0, kind: input, shape index: {}]
  %s1 = inlined_call_operand.vmem [shape: bf16[8,32,64], index: 1, kind: input, shape index: {}]
  %s2 = inlined_call_operand.vmem [shape: bf16[8,32,64], index: 2, kind: input, shape index: {}]
  %s3 = inlined_call_operand.vmem [shape: bf16[8,32,64], index: 3, kind: input, shape index: {}]
  %s4 = inlined_call_operand.vmem [shape: bf16[8,64,32], index: 4, kind: input, shape index: {}]
  %s5 = inlined_call_operand.vmem [shape: f32[1,32], index: 5, kind: input, shape index: {}]
  %s6 = inlined_call_operand.hbm [shape: f32[2,8,32], index: 6, kind: output, shape index: {}]
  %s7 = sld [smem:[#allocation0]]
  $region57: #{_lambda_.1} parent=0
    _
  %s9 = ssub.s32 1, %s7
  %s10 = scalar_select 0, %s9, %s7
  $region1: #{_lambda_.1} parent=0
    #allocation2 [shape = 'u8[8192]{0}', space=vmem, size = 0x2000, scoped, tag = 'output window, operand 0']
    #allocation3 [shape = 's32[2]{0}', space=sflag, size = 0x8, scoped, tag = 'scoped memory for _lambda_.1']
    %11 = vsyncpa [#allocation3], 0
    %s12 = scalar_lea.sflag [#allocation3], 1
    %13 = vsyncpa %s12, 0
    loop: start=0, step=1, limit=4
    $region2: #{_lambda_.1} parent=1 // loop_pre_header
      _
    $region3: #{_lambda_.1} parent=1 // loop_header
      %s15 = sphi 0, %s19
      %p16 = scmp.ge.s32.totalorder %s15, 4
      %s25 = sphi 0, %s27
      %s28 = sphi 0, %s25
      %s29 = sphi 0, %s28
      %s45 = sphi 0, %s29
      %s49 = sphi 0, %s49
      %s51 = sphi 0, %s49
      %s52 = sphi 0, %s51
      %s66 = sphi 0, %s52
      %s70 = sphi 0, %s70
      %s72 = sphi 0, %s70
      %s73 = sphi 0, %s72
      %s87 = sphi 0, %s73
      %s91 = sphi 0, %s91
      %s93 = sphi 0, %s91
      %s94 = sphi 0, %s93
      %s108 = sphi 0, %s94
      %s112 = sphi 0, %s112
      %s114 = sphi 0, %s112
      %s115 = sphi 0, %s114
      %s129 = sphi 0, %s115
      %s133 = sphi 0, %s133
      %s135 = sphi 0, %s133
      %s136 = sphi 0, %s135
      %s150 = sphi 0, %s136
      %s156 = sphi 0, %s158
      %s159 = sphi 0, %s156
      %s160 = sphi 0, %s159
      %s176 = sphi 0, %s160
    $region4: #{_lambda_.1} parent=1 // loop_header_branch
      %18 = sbr.rel (%p16) target = $region8
    $region5: #{_lambda_.1} parent=1 // loop_body
      %s20 = ssub.s32 %s15, 1
      %s21 = ssub.s32 %s15, 2
      %s22 = sadd.s32 %s15, 1
      %s23 = ssub.s32 %s15, %s22
      %p24 = scmp.eq.s32.totalorder %s23, 0
      %s26 = sadd.s32 %s25, 1
      %s27 = scalar_select %p24, %s25, %s26
      %p30 = pneg %p24
      %p31 = scmp.eq.s32.totalorder %s15, 1
      %p32 = por %p30, %p31
      %p33 = scmp.ne.s32.totalorder %s25, %s28
      %p34 = scmp.eq.s32.totalorder %s15, 0
      %p35 = por %p33, %p34
      %p36 = scmp.ne.s32.totalorder %s25, %s28
      %p37 = scmp.eq.s32.totalorder %s20, 1
      %p38 = por %p36, %p37
      %p39 = scmp.ne.s32.totalorder %s28, %s29
      %p40 = scmp.eq.s32.totalorder %s20, 0
      %p41 = por %p39, %p40
      %p42 = scmp.ne.s32.totalorder %s28, %s29
      %p43 = scmp.eq.s32.totalorder %s21, 1
      %p44 = por %p42, %p43
      %p46 = scmp.ne.s32.totalorder %s29, %s45
      %p47 = scmp.eq.s32.totalorder %s21, 0
      %p48 = por %p46, %p47
      %s50 = sadd.s32 %s49, 1
      %p53 = scmp.eq.s32.totalorder %s15, 1
      %p54 = scmp.ne.s32.totalorder %s49, %s51
      %p55 = scmp.eq.s32.totalorder %s15, 0
      %p56 = por %p54, %p55
      %p57 = scmp.ne.s32.totalorder %s49, %s51
      %p58 = scmp.eq.s32.totalorder %s20, 1
      %p59 = por %p57, %p58
      %p60 = scmp.ne.s32.totalorder %s51, %s52
      %p61 = scmp.eq.s32.totalorder %s20, 0
      %p62 = por %p60, %p61
      %p63 = scmp.ne.s32.totalorder %s51, %s52
      %p64 = scmp.eq.s32.totalorder %s21, 1
      %p65 = por %p63, %p64
      %p67 = scmp.ne.s32.totalorder %s52, %s66
      %p68 = scmp.eq.s32.totalorder %s21, 0
      %p69 = por %p67, %p68
      %s71 = sadd.s32 %s70, 1
      %p74 = scmp.eq.s32.totalorder %s15, 1
      %p75 = scmp.ne.s32.totalorder %s70, %s72
      %p76 = scmp.eq.s32.totalorder %s15, 0
      %p77 = por %p75, %p76
      %p78 = scmp.ne.s32.totalorder %s70, %s72
      %p79 = scmp.eq.s32.totalorder %s20, 1
      %p80 = por %p78, %p79
      %p81 = scmp.ne.s32.totalorder %s72, %s73
      %p82 = scmp.eq.s32.totalorder %s20, 0
      %p83 = por %p81, %p82
      %p84 = scmp.ne.s32.totalorder %s72, %s73
      %p85 = scmp.eq.s32.totalorder %s21, 1
      %p86 = por %p84, %p85
      %p88 = scmp.ne.s32.totalorder %s73, %s87
      %p89 = scmp.eq.s32.totalorder %s21, 0
      %p90 = por %p88, %p89
      %s92 = sadd.s32 %s91, 1
      %p95 = scmp.eq.s32.totalorder %s15, 1
      %p96 = scmp.ne.s32.totalorder %s91, %s93
      %p97 = scmp.eq.s32.totalorder %s15, 0
      %p98 = por %p96, %p97
      %p99 = scmp.ne.s32.totalorder %s91, %s93
      %p100 = scmp.eq.s32.totalorder %s20, 1
      %p101 = por %p99, %p100
      %p102 = scmp.ne.s32.totalorder %s93, %s94
      %p103 = scmp.eq.s32.totalorder %s20, 0
      %p104 = por %p102, %p103
      %p105 = scmp.ne.s32.totalorder %s93, %s94
      %p106 = scmp.eq.s32.totalorder %s21, 1
      %p107 = por %p105, %p106
      %p109 = scmp.ne.s32.totalorder %s94, %s108
      %p110 = scmp.eq.s32.totalorder %s21, 0
      %p111 = por %p109, %p110
      %s113 = sadd.s32 %s112, 1
      %p116 = scmp.eq.s32.totalorder %s15, 1
      %p117 = scmp.ne.s32.totalorder %s112, %s114
      %p118 = scmp.eq.s32.totalorder %s15, 0
      %p119 = por %p117, %p118
      %p120 = scmp.ne.s32.totalorder %s112, %s114
      %p121 = scmp.eq.s32.totalorder %s20, 1
      %p122 = por %p120, %p121
      %p123 = scmp.ne.s32.totalorder %s114, %s115
      %p124 = scmp.eq.s32.totalorder %s20, 0
      %p125 = por %p123, %p124
      %p126 = scmp.ne.s32.totalorder %s114, %s115
      %p127 = scmp.eq.s32.totalorder %s21, 1
      %p128 = por %p126, %p127
      %p130 = scmp.ne.s32.totalorder %s115, %s129
      %p131 = scmp.eq.s32.totalorder %s21, 0
      %p132 = por %p130, %p131
      %s134 = sadd.s32 %s133, 1
      %p137 = scmp.eq.s32.totalorder %s15, 1
      %p138 = scmp.ne.s32.totalorder %s133, %s135
      %p139 = scmp.eq.s32.totalorder %s15, 0
      %p140 = por %p138, %p139
      %p141 = scmp.ne.s32.totalorder %s133, %s135
      %p142 = scmp.eq.s32.totalorder %s20, 1
      %p143 = por %p141, %p142
      %p144 = scmp.ne.s32.totalorder %s135, %s136
      %p145 = scmp.eq.s32.totalorder %s20, 0
      %p146 = por %p144, %p145
      %p147 = scmp.ne.s32.totalorder %s135, %s136
      %p148 = scmp.eq.s32.totalorder %s21, 1
      %p149 = por %p147, %p148
      %p151 = scmp.ne.s32.totalorder %s136, %s150
      %p152 = scmp.eq.s32.totalorder %s21, 0
      %p153 = por %p151, %p152
      %s154 = ssub.s32 %s15, %s22
      %p155 = scmp.eq.s32.totalorder %s154, 0
      %s157 = sadd.s32 %s156, 1
      %s158 = scalar_select %p155, %s156, %s157
      %p161 = pneg %p155
      %p162 = scmp.eq.s32.totalorder %s15, 1
      %p163 = por %p161, %p162
      %p164 = scmp.ne.s32.totalorder %s156, %s159
      %p165 = scmp.eq.s32.totalorder %s15, 0
      %p166 = por %p164, %p165
      %p167 = scmp.ne.s32.totalorder %s156, %s159
      %p168 = scmp.eq.s32.totalorder %s20, 1
      %p169 = por %p167, %p168
      %p170 = scmp.ne.s32.totalorder %s159, %s160
      %p171 = scmp.eq.s32.totalorder %s20, 0
      %p172 = por %p170, %p171
      %p173 = scmp.ne.s32.totalorder %s159, %s160
      %p174 = scmp.eq.s32.totalorder %s21, 1
      %p175 = por %p173, %p174
      %p177 = scmp.ne.s32.totalorder %s160, %s176
      %p178 = scmp.eq.s32.totalorder %s21, 0
      %p179 = por %p177, %p178
      %p180 = scmp.le.s32.totalorder 1, %s15
      %p181 = scmp.lt.s32.totalorder %s15, 3
      %p182 = pnand %p180, %p181
      %p183 = pneg %p182
      // Predicated region
      $region9: #{_lambda_.1} parent=5 // pred_check
        _
      $region10: #{_lambda_.1} parent=5 // pred_check_branch
        %185 = sbr.rel (%p182) target = $region12
      $region11: #{_lambda_.1} parent=5 // pred_region
        %s186 = ssub.s32 %s15, 1
        // Predicated region
        $region13: #{_lambda_.1} parent=11 // pred_check
          %p187 = pneg %p62
        $region14: #{_lambda_.1} parent=11 // pred_check_branch
          %189 = sbr.rel (%p187) target = $region16
        $region15: #{_lambda_.1} parent=11 // pred_region
          _
        $region16: #{_lambda_.1} parent=11 // pred_fallthru
          _
        // Predicated region
        $region17: #{_lambda_.1} parent=11 // pred_check
          %p190 = pneg %p83
        $region18: #{_lambda_.1} parent=11 // pred_check_branch
          %192 = sbr.rel (%p190) target = $region20
        $region19: #{_lambda_.1} parent=11 // pred_region
          _
        $region20: #{_lambda_.1} parent=11 // pred_fallthru
          _
        // Predicated region
        $region21: #{_lambda_.1} parent=11 // pred_check
          %p193 = pneg %p104
        $region22: #{_lambda_.1} parent=11 // pred_check_branch
          %195 = sbr.rel (%p193) target = $region24
        $region23: #{_lambda_.1} parent=11 // pred_region
          _
        $region24: #{_lambda_.1} parent=11 // pred_fallthru
          _
        // Predicated region
        $region25: #{_lambda_.1} parent=11 // pred_check
          %p196 = pneg %p125
        $region26: #{_lambda_.1} parent=11 // pred_check_branch
          %198 = sbr.rel (%p196) target = $region28
        $region27: #{_lambda_.1} parent=11 // pred_region
          _
        $region28: #{_lambda_.1} parent=11 // pred_fallthru
          _
        // Predicated region
        $region29: #{_lambda_.1} parent=11 // pred_check
          %p199 = pneg %p146
        $region30: #{_lambda_.1} parent=11 // pred_check_branch
          %201 = sbr.rel (%p199) target = $region32
        $region31: #{_lambda_.1} parent=11 // pred_region
          _
        $region32: #{_lambda_.1} parent=11 // pred_fallthru
          _
      $region12: #{_lambda_.1} parent=5 // pred_fallthru
        _
      %p202 = scmp.lt.s32.totalorder %s15, 2
      // Predicated region
      $region33: #{_lambda_.1} parent=5 // pred_check
        %p203 = pneg %p202
      $region34: #{_lambda_.1} parent=5 // pred_check_branch
        %205 = sbr.rel (%p203) target = $region36
      $region35: #{_lambda_.1} parent=5 // pred_region
        // Predicated region
        $region37: #{_lambda_.1} parent=35 // pred_check
          %p206 = pneg %p35
        $region38: #{_lambda_.1} parent=35 // pred_check_branch
          %208 = sbr.rel (%p206) target = $region40
        $region39: #{_lambda_.1} parent=35 // pred_region
          %p209 = scmp.lt.s32.totalorder %s15, 1
          %s210 = scalar_select %p209, %s15, 1
          %s211 = smul.addr %s210, 8
          %s212 = scalar_lea.vmem %s0, %s211
        $region40: #{_lambda_.1} parent=35 // pred_fallthru
          _
      $region36: #{_lambda_.1} parent=5 // pred_fallthru
        _
      %p213 = scmp.le.s32.totalorder 1, %s15
      %p214 = scmp.lt.s32.totalorder %s15, 3
      %p215 = pnand %p213, %p214
      %p216 = pneg %p215
      // Predicated region
      $region41: #{_lambda_.1} parent=5 // pred_check
        _
      $region42: #{_lambda_.1} parent=5 // pred_check_branch
        %218 = sbr.rel (%p215) target = $region44
      $region43: #{_lambda_.1} parent=5 // pred_region
        %s219 = ssub.s32 %s15, 1
        %p220 = scmp.lt.s32.totalorder %s20, 1
        %s221 = scalar_select %p220, %s20, 1
        %s222 = smul.addr %s221, 8
        %s223 = scalar_lea.vmem %s0, %s222
        %p224 = pneg %p41
        %p225 = pneg %p38
        %p226 = pneg %p62
        %p227 = pneg %p59
        %p228 = pneg %p83
        %p229 = pneg %p80
        %p230 = pneg %p104
        %p231 = pneg %p101
        %p232 = pneg %p125
        %p233 = pneg %p122
        %p234 = pneg %p146
        %p235 = pneg %p143
        %p236 = pneg %p172
        %p237 = pneg %p169
        %s238 = sand.u32 %s159, 1
        %s239 = scalar_lea.sflag [#allocation3], %s238
        %s240 = sand.u32 %s159, 1
        %s241 = smul.addr %s240, 8
        %s242 = scalar_lea.vmem [#allocation2], %s241
        %p243 = scmp.lt.s32.totalorder %s20, 1
        %s244 = scalar_select %p243, %s20, 1
        %s245 = smul.addr %s244, 8
        %s246 = scalar_lea.vmem %s0, %s245
        %v248 = vld [vmem:[%s246] sm:$0xff]
        %v249 = vpack.c.bf16 %v248, %v248
        %v250 = vld [vmem:[%s1] sm:$0xf]
        %v251 = vld [vmem:[%s1 + $0x4] sm:$0xf]
        %v252 = vld [vmem:[%s1 + $0x8] sm:$0xf]
        %v253 = vld [vmem:[%s1 + $0xc] sm:$0xf]
        %v254 = vld [vmem:[%s1 + $0x10] sm:$0xf]
        %v255 = vld [vmem:[%s1 + $0x14] sm:$0xf]
        %v256 = vld [vmem:[%s1 + $0x18] sm:$0xf]
        %v257 = vld [vmem:[%s1 + $0x1c] sm:$0xf]
        %v258 = vld [vmem:[%s1 + $0x20] sm:$0xf]
        %v259 = vld [vmem:[%s1 + $0x24] sm:$0xf]
        %v260 = vld [vmem:[%s1 + $0x28] sm:$0xf]
        %v261 = vld [vmem:[%s1 + $0x2c] sm:$0xf]
        %v262 = vld [vmem:[%s1 + $0x30] sm:$0xf]
        %v263 = vld [vmem:[%s1 + $0x34] sm:$0xf]
        %v264 = vld [vmem:[%s1 + $0x38] sm:$0xf]
        %v265 = vld [vmem:[%s1 + $0x3c] sm:$0xf]
        %v266 = vld [vmem:[%s1 + $0x40] sm:$0xf]
        %v267 = vld [vmem:[%s1 + $0x44] sm:$0xf]
        %v268 = vld [vmem:[%s1 + $0x48] sm:$0xf]
        %v269 = vld [vmem:[%s1 + $0x4c] sm:$0xf]
        %v270 = vld [vmem:[%s1 + $0x50] sm:$0xf]
        %v271 = vld [vmem:[%s1 + $0x54] sm:$0xf]
        %v272 = vld [vmem:[%s1 + $0x58] sm:$0xf]
        %v273 = vld [vmem:[%s1 + $0x5c] sm:$0xf]
        %v274 = vld [vmem:[%s1 + $0x60] sm:$0xf]
        %v275 = vld [vmem:[%s1 + $0x64] sm:$0xf]
        %v276 = vld [vmem:[%s1 + $0x68] sm:$0xf]
        %v277 = vld [vmem:[%s1 + $0x6c] sm:$0xf]
        %v278 = vld [vmem:[%s1 + $0x70] sm:$0xf]
        %v279 = vld [vmem:[%s1 + $0x74] sm:$0xf]
        %v280 = vld [vmem:[%s1 + $0x78] sm:$0xf]
        %v281 = vld [vmem:[%s1 + $0x7c] sm:$0xf]
        %v286 = vunpack.c.l.b16 %v250
        %v287 = vunpack.c.l.b16 %v251
        %v288 = vunpack.c.l.b16 %v252
        %v289 = vunpack.c.l.b16 %v253
        %v290 = vpack.c.b16 %v287, %v286
        %v291 = vpack.c.b16 %v289, %v288
        %vm294 = vcmask 261120
        %v296 = vsel %vm294, %v249, 0
        %298 = vmatprep.subr.bf16.mxu0 0
        %299 = vmatpush1.bf16.msra.mxu0 0
        %300 = vmatprep.subr.bf16.mxu0 0
        %301 = vmatpush1.bf16.msra.mxu0 0
        %302 = vmatprep.subr.bf16.mxu0 0
        %303 = vmatpush1.bf16.msra.mxu0 0
        %304 = vmatprep.subr.bf16.mxu0 0
        %305 = vmatpush1.bf16.msra.mxu0 0
        %306 = vmatprep.subr.bf16.mxu0 0
        %307 = vmatpush1.bf16.msra.mxu0 0
        %308 = vmatprep.subr.bf16.mxu0 0
        %309 = vmatpush1.bf16.msra.mxu0 0
        %310 = vmatprep.subr.bf16.mxu0 0
        %311 = vmatpush1.bf16.msra.mxu0 %v291
        %312 = vmatprep.subr.bf16.mxu0 0
        %313 = vmatpush1.bf16.msra.mxu0 %v290
        %314 = vmatprep.subr.bf16.mxu0 0
        %315 = vmatpush2.bf16.msra.mxu0 0
        %316 = vmatprep.subr.bf16.mxu0 0
        %317 = vmatpush2.bf16.msra.mxu0 0
        %318 = vmatprep.subr.bf16.mxu0 0
        %319 = vmatpush2.bf16.msra.mxu0 0
        %320 = vmatprep.subr.bf16.mxu0 0
        %321 = vmatpush2.bf16.msra.mxu0 0
        %322 = vmatprep.subr.bf16.mxu0 0
        %323 = vmatpush2.bf16.msra.mxu0 0
        %324 = vmatprep.subr.bf16.mxu0 0
        %325 = vmatpush2.bf16.msra.mxu0 0
        %326 = vmatprep.subr.bf16.mxu0 0
        %327 = vmatpush2.bf16.msra.mxu0 0
        %328 = vmatprep.subr.bf16.mxu0 0
        %329 = vmatpush2.bf16.msra.mxu0 0
        %330 = vmatprep.mubr.bf16.mxu0 0
        %331 = vmatmul.mubr.bf16.gmra.mxu0 %v296
        %v332 = vpop.f32.mrf.mxu0
        %v333 = vadd.f32 0.0, %v332
        %v334 = vpop.f32.mrf.mxu0
        %v335 = vpop.f32.mrf.mxu0
        %v336 = vpop.f32.mrf.mxu0
        %337 = vdwg.mxu0
        %v342 = vunpack.c.l.b16 %v254
        %v343 = vunpack.c.l.b16 %v255
        %v344 = vunpack.c.l.b16 %v256
        %v345 = vunpack.c.l.b16 %v257
        %v346 = vpack.c.b16 %v343, %v342
        %v347 = vpack.c.b16 %v345, %v344
        %350 = vmatprep.subr.bf16.mxu0 0
        %351 = vmatpush1.bf16.msra.mxu0 0
        %352 = vmatprep.subr.bf16.mxu0 0
        %353 = vmatpush1.bf16.msra.mxu0 0
        %354 = vmatprep.subr.bf16.mxu0 0
        %355 = vmatpush1.bf16.msra.mxu0 0
        %356 = vmatprep.subr.bf16.mxu0 0
        %357 = vmatpush1.bf16.msra.mxu0 0
        %358 = vmatprep.subr.bf16.mxu0 0
        %359 = vmatpush1.bf16.msra.mxu0 0
        %360 = vmatprep.subr.bf16.mxu0 0
        %361 = vmatpush1.bf16.msra.mxu0 0
        %362 = vmatprep.subr.bf16.mxu0 0
        %363 = vmatpush1.bf16.msra.mxu0 %v347
        %364 = vmatprep.subr.bf16.mxu0 0
        %365 = vmatpush1.bf16.msra.mxu0 %v346
        %366 = vmatprep.subr.bf16.mxu0 0
        %367 = vmatpush2.bf16.msra.mxu0 0
        %368 = vmatprep.subr.bf16.mxu0 0
        %369 = vmatpush2.bf16.msra.mxu0 0
        %370 = vmatprep.subr.bf16.mxu0 0
        %371 = vmatpush2.bf16.msra.mxu0 0
        %372 = vmatprep.subr.bf16.mxu0 0
        %373 = vmatpush2.bf16.msra.mxu0 0
        %374 = vmatprep.subr.bf16.mxu0 0
        %375 = vmatpush2.bf16.msra.mxu0 0
        %376 = vmatprep.subr.bf16.mxu0 0
        %377 = vmatpush2.bf16.msra.mxu0 0
        %378 = vmatprep.subr.bf16.mxu0 0
        %379 = vmatpush2.bf16.msra.mxu0 0
        %380 = vmatprep.subr.bf16.mxu0 0
        %381 = vmatpush2.bf16.msra.mxu0 0
        %382 = vmatprep.mubr.bf16.mxu0 0
        %383 = vmatmul.mubr.bf16.gmra.mxu0 %v296
        %v384 = vpop.f32.mrf.mxu0
        %v385 = vadd.f32 0.0, %v384
        %v386 = vpop.f32.mrf.mxu0
        %v387 = vpop.f32.mrf.mxu0
        %v388 = vpop.f32.mrf.mxu0
        %389 = vdwg.mxu0
        %v394 = vunpack.c.l.b16 %v258
        %v395 = vunpack.c.l.b16 %v259
        %v396 = vunpack.c.l.b16 %v260
        %v397 = vunpack.c.l.b16 %v261
        %v398 = vpack.c.b16 %v395, %v394
        %v399 = vpack.c.b16 %v397, %v396
        %402 = vmatprep.subr.bf16.mxu0 0
        %403 = vmatpush1.bf16.msra.mxu0 0
        %404 = vmatprep.subr.bf16.mxu0 0
        %405 = vmatpush1.bf16.msra.mxu0 0
        %406 = vmatprep.subr.bf16.mxu0 0
        %407 = vmatpush1.bf16.msra.mxu0 0
        %408 = vmatprep.subr.bf16.mxu0 0
        %409 = vmatpush1.bf16.msra.mxu0 0
        %410 = vmatprep.subr.bf16.mxu0 0
        %411 = vmatpush1.bf16.msra.mxu0 0
        %412 = vmatprep.subr.bf16.mxu0 0
        %413 = vmatpush1.bf16.msra.mxu0 0
        %414 = vmatprep.subr.bf16.mxu0 0
        %415 = vmatpush1.bf16.msra.mxu0 %v399
        %416 = vmatprep.subr.bf16.mxu0 0
        %417 = vmatpush1.bf16.msra.mxu0 %v398
        %418 = vmatprep.subr.bf16.mxu0 0
        %419 = vmatpush2.bf16.msra.mxu0 0
        %420 = vmatprep.subr.bf16.mxu0 0
        %421 = vmatpush2.bf16.msra.mxu0 0
        %422 = vmatprep.subr.bf16.mxu0 0
        %423 = vmatpush2.bf16.msra.mxu0 0
        %424 = vmatprep.subr.bf16.mxu0 0
        %425 = vmatpush2.bf16.msra.mxu0 0
        %426 = vmatprep.subr.bf16.mxu0 0
        %427 = vmatpush2.bf16.msra.mxu0 0
        %428 = vmatprep.subr.bf16.mxu0 0
        %429 = vmatpush2.bf16.msra.mxu0 0
        %430 = vmatprep.subr.bf16.mxu0 0
        %431 = vmatpush2.bf16.msra.mxu0 0
        %432 = vmatprep.subr.bf16.mxu0 0
        %433 = vmatpush2.bf16.msra.mxu0 0
        %434 = vmatprep.mubr.bf16.mxu0 0
        %435 = vmatmul.mubr.bf16.gmra.mxu0 %v296
        %v436 = vpop.f32.mrf.mxu0
        %v437 = vadd.f32 0.0, %v436
        %v438 = vpop.f32.mrf.mxu0
        %v439 = vpop.f32.mrf.mxu0
        %v440 = vpop.f32.mrf.mxu0
        %441 = vdwg.mxu0
        %v446 = vunpack.c.l.b16 %v262
        %v447 = vunpack.c.l.b16 %v263
        %v448 = vunpack.c.l.b16 %v264
        %v449 = vunpack.c.l.b16 %v265
        %v450 = vpack.c.b16 %v447, %v446
        %v451 = vpack.c.b16 %v449, %v448
        %454 = vmatprep.subr.bf16.mxu0 0
        %455 = vmatpush1.bf16.msra.mxu0 0
        %456 = vmatprep.subr.bf16.mxu0 0
        %457 = vmatpush1.bf16.msra.mxu0 0
        %458 = vmatprep.subr.bf16.mxu0 0
        %459 = vmatpush1.bf16.msra.mxu0 0
        %460 = vmatprep.subr.bf16.mxu0 0
        %461 = vmatpush1.bf16.msra.mxu0 0
        %462 = vmatprep.subr.bf16.mxu0 0
        %463 = vmatpush1.bf16.msra.mxu0 0
        %464 = vmatprep.subr.bf16.mxu0 0
        %465 = vmatpush1.bf16.msra.mxu0 0
        %466 = vmatprep.subr.bf16.mxu0 0
        %467 = vmatpush1.bf16.msra.mxu0 %v451
        %468 = vmatprep.subr.bf16.mxu0 0
        %469 = vmatpush1.bf16.msra.mxu0 %v450
        %470 = vmatprep.subr.bf16.mxu0 0
        %471 = vmatpush2.bf16.msra.mxu0 0
        %472 = vmatprep.subr.bf16.mxu0 0
        %473 = vmatpush2.bf16.msra.mxu0 0
        %474 = vmatprep.subr.bf16.mxu0 0
        %475 = vmatpush2.bf16.msra.mxu0 0
        %476 = vmatprep.subr.bf16.mxu0 0
        %477 = vmatpush2.bf16.msra.mxu0 0
        %478 = vmatprep.subr.bf16.mxu0 0
        %479 = vmatpush2.bf16.msra.mxu0 0
        %480 = vmatprep.subr.bf16.mxu0 0
        %481 = vmatpush2.bf16.msra.mxu0 0
        %482 = vmatprep.subr.bf16.mxu0 0
        %483 = vmatpush2.bf16.msra.mxu0 0
        %484 = vmatprep.subr.bf16.mxu0 0
        %485 = vmatpush2.bf16.msra.mxu0 0
        %486 = vmatprep.mubr.bf16.mxu0 0
        %487 = vmatmul.mubr.bf16.gmra.mxu0 %v296
        %v488 = vpop.f32.mrf.mxu0
        %v489 = vadd.f32 0.0, %v488
        %v490 = vpop.f32.mrf.mxu0
        %v491 = vpop.f32.mrf.mxu0
        %v492 = vpop.f32.mrf.mxu0
        %493 = vdwg.mxu0
        %v498 = vunpack.c.l.b16 %v266
        %v499 = vunpack.c.l.b16 %v267
        %v500 = vunpack.c.l.b16 %v268
        %v501 = vunpack.c.l.b16 %v269
        %v502 = vpack.c.b16 %v499, %v498
        %v503 = vpack.c.b16 %v501, %v500
        %506 = vmatprep.subr.bf16.mxu0 0
        %507 = vmatpush1.bf16.msra.mxu0 0
        %508 = vmatprep.subr.bf16.mxu0 0
        %509 = vmatpush1.bf16.msra.mxu0 0
        %510 = vmatprep.subr.bf16.mxu0 0
        %511 = vmatpush1.bf16.msra.mxu0 0
        %512 = vmatprep.subr.bf16.mxu0 0
        %513 = vmatpush1.bf16.msra.mxu0 0
        %514 = vmatprep.subr.bf16.mxu0 0
        %515 = vmatpush1.bf16.msra.mxu0 0
        %516 = vmatprep.subr.bf16.mxu0 0
        %517 = vmatpush1.bf16.msra.mxu0 0
        %518 = vmatprep.subr.bf16.mxu0 0
        %519 = vmatpush1.bf16.msra.mxu0 %v503
        %520 = vmatprep.subr.bf16.mxu0 0
        %521 = vmatpush1.bf16.msra.mxu0 %v502
        %522 = vmatprep.subr.bf16.mxu0 0
        %523 = vmatpush2.bf16.msra.mxu0 0
        %524 = vmatprep.subr.bf16.mxu0 0
        %525 = vmatpush2.bf16.msra.mxu0 0
        %526 = vmatprep.subr.bf16.mxu0 0
        %527 = vmatpush2.bf16.msra.mxu0 0
        %528 = vmatprep.subr.bf16.mxu0 0
        %529 = vmatpush2.bf16.msra.mxu0 0
        %530 = vmatprep.subr.bf16.mxu0 0
        %531 = vmatpush2.bf16.msra.mxu0 0
        %532 = vmatprep.subr.bf16.mxu0 0
        %533 = vmatpush2.bf16.msra.mxu0 0
        %534 = vmatprep.subr.bf16.mxu0 0
        %535 = vmatpush2.bf16.msra.mxu0 0
        %536 = vmatprep.subr.bf16.mxu0 0
        %537 = vmatpush2.bf16.msra.mxu0 0
        %538 = vmatprep.mubr.bf16.mxu0 0
        %539 = vmatmul.mubr.bf16.gmra.mxu0 %v296
        %v540 = vpop.f32.mrf.mxu0
        %v541 = vadd.f32 0.0, %v540
        %v542 = vpop.f32.mrf.mxu0
        %v543 = vpop.f32.mrf.mxu0
        %v544 = vpop.f32.mrf.mxu0
        %545 = vdwg.mxu0
        %v550 = vunpack.c.l.b16 %v270
        %v551 = vunpack.c.l.b16 %v271
        %v552 = vunpack.c.l.b16 %v272
        %v553 = vunpack.c.l.b16 %v273
        %v554 = vpack.c.b16 %v551, %v550
        %v555 = vpack.c.b16 %v553, %v552
        %558 = vmatprep.subr.bf16.mxu0 0
        %559 = vmatpush1.bf16.msra.mxu0 0
        %560 = vmatprep.subr.bf16.mxu0 0
        %561 = vmatpush1.bf16.msra.mxu0 0
        %562 = vmatprep.subr.bf16.mxu0 0
        %563 = vmatpush1.bf16.msra.mxu0 0
        %564 = vmatprep.subr.bf16.mxu0 0
        %565 = vmatpush1.bf16.msra.mxu0 0
        %566 = vmatprep.subr.bf16.mxu0 0
        %567 = vmatpush1.bf16.msra.mxu0 0
        %568 = vmatprep.subr.bf16.mxu0 0
        %569 = vmatpush1.bf16.msra.mxu0 0
        %570 = vmatprep.subr.bf16.mxu0 0
        %571 = vmatpush1.bf16.msra.mxu0 %v555
        %572 = vmatprep.subr.bf16.mxu0 0
        %573 = vmatpush1.bf16.msra.mxu0 %v554
        %574 = vmatprep.subr.bf16.mxu0 0
        %575 = vmatpush2.bf16.msra.mxu0 0
        %576 = vmatprep.subr.bf16.mxu0 0
        %577 = vmatpush2.bf16.msra.mxu0 0
        %578 = vmatprep.subr.bf16.mxu0 0
        %579 = vmatpush2.bf16.msra.mxu0 0
        %580 = vmatprep.subr.bf16.mxu0 0
        %581 = vmatpush2.bf16.msra.mxu0 0
        %582 = vmatprep.subr.bf16.mxu0 0
        %583 = vmatpush2.bf16.msra.mxu0 0
        %584 = vmatprep.subr.bf16.mxu0 0
        %585 = vmatpush2.bf16.msra.mxu0 0
        %586 = vmatprep.subr.bf16.mxu0 0
        %587 = vmatpush2.bf16.msra.mxu0 0
        %588 = vmatprep.subr.bf16.mxu0 0
        %589 = vmatpush2.bf16.msra.mxu0 0
        %590 = vmatprep.mubr.bf16.mxu0 0
        %591 = vmatmul.mubr.bf16.gmra.mxu0 %v296
        %v592 = vpop.f32.mrf.mxu0
        %v593 = vadd.f32 0.0, %v592
        %v594 = vpop.f32.mrf.mxu0
        %v595 = vpop.f32.mrf.mxu0
        %v596 = vpop.f32.mrf.mxu0
        %597 = vdwg.mxu0
        %v602 = vunpack.c.l.b16 %v274
        %v603 = vunpack.c.l.b16 %v275
        %v604 = vunpack.c.l.b16 %v276
        %v605 = vunpack.c.l.b16 %v277
        %v606 = vpack.c.b16 %v603, %v602
        %v607 = vpack.c.b16 %v605, %v604
        %610 = vmatprep.subr.bf16.mxu0 0
        %611 = vmatpush1.bf16.msra.mxu0 0
        %612 = vmatprep.subr.bf16.mxu0 0
        %613 = vmatpush1.bf16.msra.mxu0 0
        %614 = vmatprep.subr.bf16.mxu0 0
        %615 = vmatpush1.bf16.msra.mxu0 0
        %616 = vmatprep.subr.bf16.mxu0 0
        %617 = vmatpush1.bf16.msra.mxu0 0
        %618 = vmatprep.subr.bf16.mxu0 0
        %619 = vmatpush1.bf16.msra.mxu0 0
        %620 = vmatprep.subr.bf16.mxu0 0
        %621 = vmatpush1.bf16.msra.mxu0 0
        %622 = vmatprep.subr.bf16.mxu0 0
        %623 = vmatpush1.bf16.msra.mxu0 %v607
        %624 = vmatprep.subr.bf16.mxu0 0
        %625 = vmatpush1.bf16.msra.mxu0 %v606
        %626 = vmatprep.subr.bf16.mxu0 0
        %627 = vmatpush2.bf16.msra.mxu0 0
        %628 = vmatprep.subr.bf16.mxu0 0
        %629 = vmatpush2.bf16.msra.mxu0 0
        %630 = vmatprep.subr.bf16.mxu0 0
        %631 = vmatpush2.bf16.msra.mxu0 0
        %632 = vmatprep.subr.bf16.mxu0 0
        %633 = vmatpush2.bf16.msra.mxu0 0
        %634 = vmatprep.subr.bf16.mxu0 0
        %635 = vmatpush2.bf16.msra.mxu0 0
        %636 = vmatprep.subr.bf16.mxu0 0
        %637 = vmatpush2.bf16.msra.mxu0 0
        %638 = vmatprep.subr.bf16.mxu0 0
        %639 = vmatpush2.bf16.msra.mxu0 0
        %640 = vmatprep.subr.bf16.mxu0 0
        %641 = vmatpush2.bf16.msra.mxu0 0
        %642 = vmatprep.mubr.bf16.mxu0 0
        %643 = vmatmul.mubr.bf16.gmra.mxu0 %v296
        %v644 = vpop.f32.mrf.mxu0
        %v645 = vadd.f32 0.0, %v644
        %v646 = vpop.f32.mrf.mxu0
        %v647 = vpop.f32.mrf.mxu0
        %v648 = vpop.f32.mrf.mxu0
        %649 = vdwg.mxu0
        %v654 = vunpack.c.l.b16 %v278
        %v655 = vunpack.c.l.b16 %v279
        %v656 = vunpack.c.l.b16 %v280
        %v657 = vunpack.c.l.b16 %v281
        %v658 = vpack.c.b16 %v655, %v654
        %v659 = vpack.c.b16 %v657, %v656
        %662 = vmatprep.subr.bf16.mxu0 0
        %663 = vmatpush1.bf16.msra.mxu0 0
        %664 = vmatprep.subr.bf16.mxu0 0
        %665 = vmatpush1.bf16.msra.mxu0 0
        %666 = vmatprep.subr.bf16.mxu0 0
        %667 = vmatpush1.bf16.msra.mxu0 0
        %668 = vmatprep.subr.bf16.mxu0 0
        %669 = vmatpush1.bf16.msra.mxu0 0
        %670 = vmatprep.subr.bf16.mxu0 0
        %671 = vmatpush1.bf16.msra.mxu0 0
        %672 = vmatprep.subr.bf16.mxu0 0
        %673 = vmatpush1.bf16.msra.mxu0 0
        %674 = vmatprep.subr.bf16.mxu0 0
        %675 = vmatpush1.bf16.msra.mxu0 %v659
        %676 = vmatprep.subr.bf16.mxu0 0
        %677 = vmatpush1.bf16.msra.mxu0 %v658
        %678 = vmatprep.subr.bf16.mxu0 0
        %679 = vmatpush2.bf16.msra.mxu0 0
        %680 = vmatprep.subr.bf16.mxu0 0
        %681 = vmatpush2.bf16.msra.mxu0 0
        %682 = vmatprep.subr.bf16.mxu0 0
        %683 = vmatpush2.bf16.msra.mxu0 0
        %684 = vmatprep.subr.bf16.mxu0 0
        %685 = vmatpush2.bf16.msra.mxu0 0
        %686 = vmatprep.subr.bf16.mxu0 0
        %687 = vmatpush2.bf16.msra.mxu0 0
        %688 = vmatprep.subr.bf16.mxu0 0
        %689 = vmatpush2.bf16.msra.mxu0 0
        %690 = vmatprep.subr.bf16.mxu0 0
        %691 = vmatpush2.bf16.msra.mxu0 0
        %692 = vmatprep.subr.bf16.mxu0 0
        %693 = vmatpush2.bf16.msra.mxu0 0
        %694 = vmatprep.mubr.bf16.mxu0 0
        %695 = vmatmul.mubr.bf16.gmra.mxu0 %v296
        %v696 = vpop.f32.mrf.mxu0
        %v697 = vadd.f32 0.0, %v696
        %v698 = vpop.f32.mrf.mxu0
        %v699 = vpop.f32.mrf.mxu0
        %v700 = vpop.f32.mrf.mxu0
        %701 = vdwg.mxu0
        %v702 = vld [vmem:[%s2] sm:$0xf]
        %v703 = vld [vmem:[%s2 + $0x4] sm:$0xf]
        %v704 = vld [vmem:[%s2 + $0x8] sm:$0xf]
        %v705 = vld [vmem:[%s2 + $0xc] sm:$0xf]
        %v706 = vld [vmem:[%s2 + $0x10] sm:$0xf]
        %v707 = vld [vmem:[%s2 + $0x14] sm:$0xf]
        %v708 = vld [vmem:[%s2 + $0x18] sm:$0xf]
        %v709 = vld [vmem:[%s2 + $0x1c] sm:$0xf]
        %v710 = vld [vmem:[%s2 + $0x20] sm:$0xf]
        %v711 = vld [vmem:[%s2 + $0x24] sm:$0xf]
        %v712 = vld [vmem:[%s2 + $0x28] sm:$0xf]
        %v713 = vld [vmem:[%s2 + $0x2c] sm:$0xf]
        %v714 = vld [vmem:[%s2 + $0x30] sm:$0xf]
        %v715 = vld [vmem:[%s2 + $0x34] sm:$0xf]
        %v716 = vld [vmem:[%s2 + $0x38] sm:$0xf]
        %v717 = vld [vmem:[%s2 + $0x3c] sm:$0xf]
        %v718 = vld [vmem:[%s2 + $0x40] sm:$0xf]
        %v719 = vld [vmem:[%s2 + $0x44] sm:$0xf]
        %v720 = vld [vmem:[%s2 + $0x48] sm:$0xf]
        %v721 = vld [vmem:[%s2 + $0x4c] sm:$0xf]
        %v722 = vld [vmem:[%s2 + $0x50] sm:$0xf]
        %v723 = vld [vmem:[%s2 + $0x54] sm:$0xf]
        %v724 = vld [vmem:[%s2 + $0x58] sm:$0xf]
        %v725 = vld [vmem:[%s2 + $0x5c] sm:$0xf]
        %v726 = vld [vmem:[%s2 + $0x60] sm:$0xf]
        %v727 = vld [vmem:[%s2 + $0x64] sm:$0xf]
        %v728 = vld [vmem:[%s2 + $0x68] sm:$0xf]
        %v729 = vld [vmem:[%s2 + $0x6c] sm:$0xf]
        %v730 = vld [vmem:[%s2 + $0x70] sm:$0xf]
        %v731 = vld [vmem:[%s2 + $0x74] sm:$0xf]
        %v732 = vld [vmem:[%s2 + $0x78] sm:$0xf]
        %v733 = vld [vmem:[%s2 + $0x7c] sm:$0xf]
        %v738 = vunpack.c.l.b16 %v702
        %v739 = vunpack.c.l.b16 %v703
        %v740 = vunpack.c.l.b16 %v704
        %v741 = vunpack.c.l.b16 %v705
        %v742 = vpack.c.b16 %v739, %v738
        %v743 = vpack.c.b16 %v741, %v740
        %746 = vmatprep.subr.bf16.mxu0 0
        %747 = vmatpush1.bf16.msra.mxu0 0
        %748 = vmatprep.subr.bf16.mxu0 0
        %749 = vmatpush1.bf16.msra.mxu0 0
        %750 = vmatprep.subr.bf16.mxu0 0
        %751 = vmatpush1.bf16.msra.mxu0 0
        %752 = vmatprep.subr.bf16.mxu0 0
        %753 = vmatpush1.bf16.msra.mxu0 0
        %754 = vmatprep.subr.bf16.mxu0 0
        %755 = vmatpush1.bf16.msra.mxu0 0
        %756 = vmatprep.subr.bf16.mxu0 0
        %757 = vmatpush1.bf16.msra.mxu0 0
        %758 = vmatprep.subr.bf16.mxu0 0
        %759 = vmatpush1.bf16.msra.mxu0 %v743
        %760 = vmatprep.subr.bf16.mxu0 0
        %761 = vmatpush1.bf16.msra.mxu0 %v742
        %762 = vmatprep.subr.bf16.mxu0 0
        %763 = vmatpush2.bf16.msra.mxu0 0
        %764 = vmatprep.subr.bf16.mxu0 0
        %765 = vmatpush2.bf16.msra.mxu0 0
        %766 = vmatprep.subr.bf16.mxu0 0
        %767 = vmatpush2.bf16.msra.mxu0 0
        %768 = vmatprep.subr.bf16.mxu0 0
        %769 = vmatpush2.bf16.msra.mxu0 0
        %770 = vmatprep.subr.bf16.mxu0 0
        %771 = vmatpush2.bf16.msra.mxu0 0
        %772 = vmatprep.subr.bf16.mxu0 0
        %773 = vmatpush2.bf16.msra.mxu0 0
        %774 = vmatprep.subr.bf16.mxu0 0
        %775 = vmatpush2.bf16.msra.mxu0 0
        %776 = vmatprep.subr.bf16.mxu0 0
        %777 = vmatpush2.bf16.msra.mxu0 0
        %778 = vmatprep.mubr.bf16.mxu0 0
        %779 = vmatmul.mubr.bf16.gmra.mxu0 %v296
        %v780 = vpop.f32.mrf.mxu0
        %v781 = vadd.f32 0.0, %v780
        %v782 = vpop.f32.mrf.mxu0
        %v783 = vpop.f32.mrf.mxu0
        %v784 = vpop.f32.mrf.mxu0
        %785 = vdwg.mxu0
        %v790 = vunpack.c.l.b16 %v706
        %v791 = vunpack.c.l.b16 %v707
        %v792 = vunpack.c.l.b16 %v708
        %v793 = vunpack.c.l.b16 %v709
        %v794 = vpack.c.b16 %v791, %v790
        %v795 = vpack.c.b16 %v793, %v792
        %798 = vmatprep.subr.bf16.mxu0 0
        %799 = vmatpush1.bf16.msra.mxu0 0
        %800 = vmatprep.subr.bf16.mxu0 0
        %801 = vmatpush1.bf16.msra.mxu0 0
        %802 = vmatprep.subr.bf16.mxu0 0
        %803 = vmatpush1.bf16.msra.mxu0 0
        %804 = vmatprep.subr.bf16.mxu0 0
        %805 = vmatpush1.bf16.msra.mxu0 0
        %806 = vmatprep.subr.bf16.mxu0 0
        %807 = vmatpush1.bf16.msra.mxu0 0
        %808 = vmatprep.subr.bf16.mxu0 0
        %809 = vmatpush1.bf16.msra.mxu0 0
        %810 = vmatprep.subr.bf16.mxu0 0
        %811 = vmatpush1.bf16.msra.mxu0 %v795
        %812 = vmatprep.subr.bf16.mxu0 0
        %813 = vmatpush1.bf16.msra.mxu0 %v794
        %814 = vmatprep.subr.bf16.mxu0 0
        %815 = vmatpush2.bf16.msra.mxu0 0
        %816 = vmatprep.subr.bf16.mxu0 0
        %817 = vmatpush2.bf16.msra.mxu0 0
        %818 = vmatprep.subr.bf16.mxu0 0
        %819 = vmatpush2.bf16.msra.mxu0 0
        %820 = vmatprep.subr.bf16.mxu0 0
        %821 = vmatpush2.bf16.msra.mxu0 0
        %822 = vmatprep.subr.bf16.mxu0 0
        %823 = vmatpush2.bf16.msra.mxu0 0
        %824 = vmatprep.subr.bf16.mxu0 0
        %825 = vmatpush2.bf16.msra.mxu0 0
        %826 = vmatprep.subr.bf16.mxu0 0
        %827 = vmatpush2.bf16.msra.mxu0 0
        %828 = vmatprep.subr.bf16.mxu0 0
        %829 = vmatpush2.bf16.msra.mxu0 0
        %830 = vmatprep.mubr.bf16.mxu0 0
        %831 = vmatmul.mubr.bf16.gmra.mxu0 %v296
        %v832 = vpop.f32.mrf.mxu0
        %v833 = vadd.f32 0.0, %v832
        %v834 = vpop.f32.mrf.mxu0
        %v835 = vpop.f32.mrf.mxu0
        %v836 = vpop.f32.mrf.mxu0
        %837 = vdwg.mxu0
        %v842 = vunpack.c.l.b16 %v710
        %v843 = vunpack.c.l.b16 %v711
        %v844 = vunpack.c.l.b16 %v712
        %v845 = vunpack.c.l.b16 %v713
        %v846 = vpack.c.b16 %v843, %v842
        %v847 = vpack.c.b16 %v845, %v844
        %850 = vmatprep.subr.bf16.mxu0 0
        %851 = vmatpush1.bf16.msra.mxu0 0
        %852 = vmatprep.subr.bf16.mxu0 0
        %853 = vmatpush1.bf16.msra.mxu0 0
        %854 = vmatprep.subr.bf16.mxu0 0
        %855 = vmatpush1.bf16.msra.mxu0 0
        %856 = vmatprep.subr.bf16.mxu0 0
        %857 = vmatpush1.bf16.msra.mxu0 0
        %858 = vmatprep.subr.bf16.mxu0 0
        %859 = vmatpush1.bf16.msra.mxu0 0
        %860 = vmatprep.subr.bf16.mxu0 0
        %861 = vmatpush1.bf16.msra.mxu0 0
        %862 = vmatprep.subr.bf16.mxu0 0
        %863 = vmatpush1.bf16.msra.mxu0 %v847
        %864 = vmatprep.subr.bf16.mxu0 0
        %865 = vmatpush1.bf16.msra.mxu0 %v846
        %866 = vmatprep.subr.bf16.mxu0 0
        %867 = vmatpush2.bf16.msra.mxu0 0
        %868 = vmatprep.subr.bf16.mxu0 0
        %869 = vmatpush2.bf16.msra.mxu0 0
        %870 = vmatprep.subr.bf16.mxu0 0
        %871 = vmatpush2.bf16.msra.mxu0 0
        %872 = vmatprep.subr.bf16.mxu0 0
        %873 = vmatpush2.bf16.msra.mxu0 0
        %874 = vmatprep.subr.bf16.mxu0 0
        %875 = vmatpush2.bf16.msra.mxu0 0
        %876 = vmatprep.subr.bf16.mxu0 0
        %877 = vmatpush2.bf16.msra.mxu0 0
        %878 = vmatprep.subr.bf16.mxu0 0
        %879 = vmatpush2.bf16.msra.mxu0 0
        %880 = vmatprep.subr.bf16.mxu0 0
        %881 = vmatpush2.bf16.msra.mxu0 0
        %882 = vmatprep.mubr.bf16.mxu0 0
        %883 = vmatmul.mubr.bf16.gmra.mxu0 %v296
        %v884 = vpop.f32.mrf.mxu0
        %v885 = vadd.f32 0.0, %v884
        %v886 = vpop.f32.mrf.mxu0
        %v887 = vpop.f32.mrf.mxu0
        %v888 = vpop.f32.mrf.mxu0
        %889 = vdwg.mxu0
        %v894 = vunpack.c.l.b16 %v714
        %v895 = vunpack.c.l.b16 %v715
        %v896 = vunpack.c.l.b16 %v716
        %v897 = vunpack.c.l.b16 %v717
        %v898 = vpack.c.b16 %v895, %v894
        %v899 = vpack.c.b16 %v897, %v896
        %902 = vmatprep.subr.bf16.mxu0 0
        %903 = vmatpush1.bf16.msra.mxu0 0
        %904 = vmatprep.subr.bf16.mxu0 0
        %905 = vmatpush1.bf16.msra.mxu0 0
        %906 = vmatprep.subr.bf16.mxu0 0
        %907 = vmatpush1.bf16.msra.mxu0 0
        %908 = vmatprep.subr.bf16.mxu0 0
        %909 = vmatpush1.bf16.msra.mxu0 0
        %910 = vmatprep.subr.bf16.mxu0 0
        %911 = vmatpush1.bf16.msra.mxu0 0
        %912 = vmatprep.subr.bf16.mxu0 0
        %913 = vmatpush1.bf16.msra.mxu0 0
        %914 = vmatprep.subr.bf16.mxu0 0
        %915 = vmatpush1.bf16.msra.mxu0 %v899
        %916 = vmatprep.subr.bf16.mxu0 0
        %917 = vmatpush1.bf16.msra.mxu0 %v898
        %918 = vmatprep.subr.bf16.mxu0 0
        %919 = vmatpush2.bf16.msra.mxu0 0
        %920 = vmatprep.subr.bf16.mxu0 0
        %921 = vmatpush2.bf16.msra.mxu0 0
        %922 = vmatprep.subr.bf16.mxu0 0
        %923 = vmatpush2.bf16.msra.mxu0 0
        %924 = vmatprep.subr.bf16.mxu0 0
        %925 = vmatpush2.bf16.msra.mxu0 0
        %926 = vmatprep.subr.bf16.mxu0 0
        %927 = vmatpush2.bf16.msra.mxu0 0
        %928 = vmatprep.subr.bf16.mxu0 0
        %929 = vmatpush2.bf16.msra.mxu0 0
        %930 = vmatprep.subr.bf16.mxu0 0
        %931 = vmatpush2.bf16.msra.mxu0 0
        %932 = vmatprep.subr.bf16.mxu0 0
        %933 = vmatpush2.bf16.msra.mxu0 0
        %934 = vmatprep.mubr.bf16.mxu0 0
        %935 = vmatmul.mubr.bf16.gmra.mxu0 %v296
        %v936 = vpop.f32.mrf.mxu0
        %v937 = vadd.f32 0.0, %v936
        %v938 = vpop.f32.mrf.mxu0
        %v939 = vpop.f32.mrf.mxu0
        %v940 = vpop.f32.mrf.mxu0
        %941 = vdwg.mxu0
        %v946 = vunpack.c.l.b16 %v718
        %v947 = vunpack.c.l.b16 %v719
        %v948 = vunpack.c.l.b16 %v720
        %v949 = vunpack.c.l.b16 %v721
        %v950 = vpack.c.b16 %v947, %v946
        %v951 = vpack.c.b16 %v949, %v948
        %954 = vmatprep.subr.bf16.mxu0 0
        %955 = vmatpush1.bf16.msra.mxu0 0
        %956 = vmatprep.subr.bf16.mxu0 0
        %957 = vmatpush1.bf16.msra.mxu0 0
        %958 = vmatprep.subr.bf16.mxu0 0
        %959 = vmatpush1.bf16.msra.mxu0 0
        %960 = vmatprep.subr.bf16.mxu0 0
        %961 = vmatpush1.bf16.msra.mxu0 0
        %962 = vmatprep.subr.bf16.mxu0 0
        %963 = vmatpush1.bf16.msra.mxu0 0
        %964 = vmatprep.subr.bf16.mxu0 0
        %965 = vmatpush1.bf16.msra.mxu0 0
        %966 = vmatprep.subr.bf16.mxu0 0
        %967 = vmatpush1.bf16.msra.mxu0 %v951
        %968 = vmatprep.subr.bf16.mxu0 0
        %969 = vmatpush1.bf16.msra.mxu0 %v950
        %970 = vmatprep.subr.bf16.mxu0 0
        %971 = vmatpush2.bf16.msra.mxu0 0
        %972 = vmatprep.subr.bf16.mxu0 0
        %973 = vmatpush2.bf16.msra.mxu0 0
        %974 = vmatprep.subr.bf16.mxu0 0
        %975 = vmatpush2.bf16.msra.mxu0 0
        %976 = vmatprep.subr.bf16.mxu0 0
        %977 = vmatpush2.bf16.msra.mxu0 0
        %978 = vmatprep.subr.bf16.mxu0 0
        %979 = vmatpush2.bf16.msra.mxu0 0
        %980 = vmatprep.subr.bf16.mxu0 0
        %981 = vmatpush2.bf16.msra.mxu0 0
        %982 = vmatprep.subr.bf16.mxu0 0
        %983 = vmatpush2.bf16.msra.mxu0 0
        %984 = vmatprep.subr.bf16.mxu0 0
        %985 = vmatpush2.bf16.msra.mxu0 0
        %986 = vmatprep.mubr.bf16.mxu0 0
        %987 = vmatmul.mubr.bf16.gmra.mxu0 %v296
        %v988 = vpop.f32.mrf.mxu0
        %v989 = vadd.f32 0.0, %v988
        %v990 = vpop.f32.mrf.mxu0
        %v991 = vpop.f32.mrf.mxu0
        %v992 = vpop.f32.mrf.mxu0
        %993 = vdwg.mxu0
        %v998 = vunpack.c.l.b16 %v722
        %v999 = vunpack.c.l.b16 %v723
        %v1000 = vunpack.c.l.b16 %v724
        %v1001 = vunpack.c.l.b16 %v725
        %v1002 = vpack.c.b16 %v999, %v998
        %v1003 = vpack.c.b16 %v1001, %v1000
        %1006 = vmatprep.subr.bf16.mxu0 0
        %1007 = vmatpush1.bf16.msra.mxu0 0
        %1008 = vmatprep.subr.bf16.mxu0 0
        %1009 = vmatpush1.bf16.msra.mxu0 0
        %1010 = vmatprep.subr.bf16.mxu0 0
        %1011 = vmatpush1.bf16.msra.mxu0 0
        %1012 = vmatprep.subr.bf16.mxu0 0
        %1013 = vmatpush1.bf16.msra.mxu0 0
        %1014 = vmatprep.subr.bf16.mxu0 0
        %1015 = vmatpush1.bf16.msra.mxu0 0
        %1016 = vmatprep.subr.bf16.mxu0 0
        %1017 = vmatpush1.bf16.msra.mxu0 0
        %1018 = vmatprep.subr.bf16.mxu0 0
        %1019 = vmatpush1.bf16.msra.mxu0 %v1003
        %1020 = vmatprep.subr.bf16.mxu0 0
        %1021 = vmatpush1.bf16.msra.mxu0 %v1002
        %1022 = vmatprep.subr.bf16.mxu0 0
        %1023 = vmatpush2.bf16.msra.mxu0 0
        %1024 = vmatprep.subr.bf16.mxu0 0
        %1025 = vmatpush2.bf16.msra.mxu0 0
        %1026 = vmatprep.subr.bf16.mxu0 0
        %1027 = vmatpush2.bf16.msra.mxu0 0
        %1028 = vmatprep.subr.bf16.mxu0 0
        %1029 = vmatpush2.bf16.msra.mxu0 0
        %1030 = vmatprep.subr.bf16.mxu0 0
        %1031 = vmatpush2.bf16.msra.mxu0 0
        %1032 = vmatprep.subr.bf16.mxu0 0
        %1033 = vmatpush2.bf16.msra.mxu0 0
        %1034 = vmatprep.subr.bf16.mxu0 0
        %1035 = vmatpush2.bf16.msra.mxu0 0
        %1036 = vmatprep.subr.bf16.mxu0 0
        %1037 = vmatpush2.bf16.msra.mxu0 0
        %1038 = vmatprep.mubr.bf16.mxu0 0
        %1039 = vmatmul.mubr.bf16.gmra.mxu0 %v296
        %v1040 = vpop.f32.mrf.mxu0
        %v1041 = vadd.f32 0.0, %v1040
        %v1042 = vpop.f32.mrf.mxu0
        %v1043 = vpop.f32.mrf.mxu0
        %v1044 = vpop.f32.mrf.mxu0
        %1045 = vdwg.mxu0
        %v1050 = vunpack.c.l.b16 %v726
        %v1051 = vunpack.c.l.b16 %v727
        %v1052 = vunpack.c.l.b16 %v728
        %v1053 = vunpack.c.l.b16 %v729
        %v1054 = vpack.c.b16 %v1051, %v1050
        %v1055 = vpack.c.b16 %v1053, %v1052
        %1058 = vmatprep.subr.bf16.mxu0 0
        %1059 = vmatpush1.bf16.msra.mxu0 0
        %1060 = vmatprep.subr.bf16.mxu0 0
        %1061 = vmatpush1.bf16.msra.mxu0 0
        %1062 = vmatprep.subr.bf16.mxu0 0
        %1063 = vmatpush1.bf16.msra.mxu0 0
        %1064 = vmatprep.subr.bf16.mxu0 0
        %1065 = vmatpush1.bf16.msra.mxu0 0
        %1066 = vmatprep.subr.bf16.mxu0 0
        %1067 = vmatpush1.bf16.msra.mxu0 0
        %1068 = vmatprep.subr.bf16.mxu0 0
        %1069 = vmatpush1.bf16.msra.mxu0 0
        %1070 = vmatprep.subr.bf16.mxu0 0
        %1071 = vmatpush1.bf16.msra.mxu0 %v1055
        %1072 = vmatprep.subr.bf16.mxu0 0
        %1073 = vmatpush1.bf16.msra.mxu0 %v1054
        %1074 = vmatprep.subr.bf16.mxu0 0
        %1075 = vmatpush2.bf16.msra.mxu0 0
        %1076 = vmatprep.subr.bf16.mxu0 0
        %1077 = vmatpush2.bf16.msra.mxu0 0
        %1078 = vmatprep.subr.bf16.mxu0 0
        %1079 = vmatpush2.bf16.msra.mxu0 0
        %1080 = vmatprep.subr.bf16.mxu0 0
        %1081 = vmatpush2.bf16.msra.mxu0 0
        %1082 = vmatprep.subr.bf16.mxu0 0
        %1083 = vmatpush2.bf16.msra.mxu0 0
        %1084 = vmatprep.subr.bf16.mxu0 0
        %1085 = vmatpush2.bf16.msra.mxu0 0
        %1086 = vmatprep.subr.bf16.mxu0 0
        %1087 = vmatpush2.bf16.msra.mxu0 0
        %1088 = vmatprep.subr.bf16.mxu0 0
        %1089 = vmatpush2.bf16.msra.mxu0 0
        %1090 = vmatprep.mubr.bf16.mxu0 0
        %1091 = vmatmul.mubr.bf16.gmra.mxu0 %v296
        %v1092 = vpop.f32.mrf.mxu0
        %v1093 = vadd.f32 0.0, %v1092
        %v1094 = vpop.f32.mrf.mxu0
        %v1095 = vpop.f32.mrf.mxu0
        %v1096 = vpop.f32.mrf.mxu0
        %1097 = vdwg.mxu0
        %v1102 = vunpack.c.l.b16 %v730
        %v1103 = vunpack.c.l.b16 %v731
        %v1104 = vunpack.c.l.b16 %v732
        %v1105 = vunpack.c.l.b16 %v733
        %v1106 = vpack.c.b16 %v1103, %v1102
        %v1107 = vpack.c.b16 %v1105, %v1104
        %1110 = vmatprep.subr.bf16.mxu0 0
        %1111 = vmatpush1.bf16.msra.mxu0 0
        %1112 = vmatprep.subr.bf16.mxu0 0
        %1113 = vmatpush1.bf16.msra.mxu0 0
        %1114 = vmatprep.subr.bf16.mxu0 0
        %1115 = vmatpush1.bf16.msra.mxu0 0
        %1116 = vmatprep.subr.bf16.mxu0 0
        %1117 = vmatpush1.bf16.msra.mxu0 0
        %1118 = vmatprep.subr.bf16.mxu0 0
        %1119 = vmatpush1.bf16.msra.mxu0 0
        %1120 = vmatprep.subr.bf16.mxu0 0
        %1121 = vmatpush1.bf16.msra.mxu0 0
        %1122 = vmatprep.subr.bf16.mxu0 0
        %1123 = vmatpush1.bf16.msra.mxu0 %v1107
        %1124 = vmatprep.subr.bf16.mxu0 0
        %1125 = vmatpush1.bf16.msra.mxu0 %v1106
        %1126 = vmatprep.subr.bf16.mxu0 0
        %1127 = vmatpush2.bf16.msra.mxu0 0
        %1128 = vmatprep.subr.bf16.mxu0 0
        %1129 = vmatpush2.bf16.msra.mxu0 0
        %1130 = vmatprep.subr.bf16.mxu0 0
        %1131 = vmatpush2.bf16.msra.mxu0 0
        %1132 = vmatprep.subr.bf16.mxu0 0
        %1133 = vmatpush2.bf16.msra.mxu0 0
        %1134 = vmatprep.subr.bf16.mxu0 0
        %1135 = vmatpush2.bf16.msra.mxu0 0
        %1136 = vmatprep.subr.bf16.mxu0 0
        %1137 = vmatpush2.bf16.msra.mxu0 0
        %1138 = vmatprep.subr.bf16.mxu0 0
        %1139 = vmatpush2.bf16.msra.mxu0 0
        %1140 = vmatprep.subr.bf16.mxu0 0
        %1141 = vmatpush2.bf16.msra.mxu0 0
        %1142 = vmatprep.mubr.bf16.mxu0 0
        %1143 = vmatmul.mubr.bf16.gmra.mxu0 %v296
        %v1144 = vpop.f32.mrf.mxu0
        %v1145 = vadd.f32 0.0, %v1144
        %v1146 = vpop.f32.mrf.mxu0
        %v1147 = vpop.f32.mrf.mxu0
        %v1148 = vpop.f32.mrf.mxu0
        %1149 = vdwg.mxu0
        %v1150 = vld [vmem:[%s3] sm:$0xf]
        %v1151 = vld [vmem:[%s3 + $0x4] sm:$0xf]
        %v1152 = vld [vmem:[%s3 + $0x8] sm:$0xf]
        %v1153 = vld [vmem:[%s3 + $0xc] sm:$0xf]
        %v1154 = vld [vmem:[%s3 + $0x10] sm:$0xf]
        %v1155 = vld [vmem:[%s3 + $0x14] sm:$0xf]
        %v1156 = vld [vmem:[%s3 + $0x18] sm:$0xf]
        %v1157 = vld [vmem:[%s3 + $0x1c] sm:$0xf]
        %v1158 = vld [vmem:[%s3 + $0x20] sm:$0xf]
        %v1159 = vld [vmem:[%s3 + $0x24] sm:$0xf]
        %v1160 = vld [vmem:[%s3 + $0x28] sm:$0xf]
        %v1161 = vld [vmem:[%s3 + $0x2c] sm:$0xf]
        %v1162 = vld [vmem:[%s3 + $0x30] sm:$0xf]
        %v1163 = vld [vmem:[%s3 + $0x34] sm:$0xf]
        %v1164 = vld [vmem:[%s3 + $0x38] sm:$0xf]
        %v1165 = vld [vmem:[%s3 + $0x3c] sm:$0xf]
        %v1166 = vld [vmem:[%s3 + $0x40] sm:$0xf]
        %v1167 = vld [vmem:[%s3 + $0x44] sm:$0xf]
        %v1168 = vld [vmem:[%s3 + $0x48] sm:$0xf]
        %v1169 = vld [vmem:[%s3 + $0x4c] sm:$0xf]
        %v1170 = vld [vmem:[%s3 + $0x50] sm:$0xf]
        %v1171 = vld [vmem:[%s3 + $0x54] sm:$0xf]
        %v1172 = vld [vmem:[%s3 + $0x58] sm:$0xf]
        %v1173 = vld [vmem:[%s3 + $0x5c] sm:$0xf]
        %v1174 = vld [vmem:[%s3 + $0x60] sm:$0xf]
        %v1175 = vld [vmem:[%s3 + $0x64] sm:$0xf]
        %v1176 = vld [vmem:[%s3 + $0x68] sm:$0xf]
        %v1177 = vld [vmem:[%s3 + $0x6c] sm:$0xf]
        %v1178 = vld [vmem:[%s3 + $0x70] sm:$0xf]
        %v1179 = vld [vmem:[%s3 + $0x74] sm:$0xf]
        %v1180 = vld [vmem:[%s3 + $0x78] sm:$0xf]
        %v1181 = vld [vmem:[%s3 + $0x7c] sm:$0xf]
        %v1186 = vunpack.c.l.b16 %v1150
        %v1187 = vunpack.c.l.b16 %v1151
        %v1188 = vunpack.c.l.b16 %v1152
        %v1189 = vunpack.c.l.b16 %v1153
        %v1190 = vpack.c.b16 %v1187, %v1186
        %v1191 = vpack.c.b16 %v1189, %v1188
        %1194 = vmatprep.subr.bf16.mxu0 0
        %1195 = vmatpush1.bf16.msra.mxu0 0
        %1196 = vmatprep.subr.bf16.mxu0 0
        %1197 = vmatpush1.bf16.msra.mxu0 0
        %1198 = vmatprep.subr.bf16.mxu0 0
        %1199 = vmatpush1.bf16.msra.mxu0 0
        %1200 = vmatprep.subr.bf16.mxu0 0
        %1201 = vmatpush1.bf16.msra.mxu0 0
        %1202 = vmatprep.subr.bf16.mxu0 0
        %1203 = vmatpush1.bf16.msra.mxu0 0
        %1204 = vmatprep.subr.bf16.mxu0 0
        %1205 = vmatpush1.bf16.msra.mxu0 0
        %1206 = vmatprep.subr.bf16.mxu0 0
        %1207 = vmatpush1.bf16.msra.mxu0 %v1191
        %1208 = vmatprep.subr.bf16.mxu0 0
        %1209 = vmatpush1.bf16.msra.mxu0 %v1190
        %1210 = vmatprep.subr.bf16.mxu0 0
        %1211 = vmatpush2.bf16.msra.mxu0 0
        %1212 = vmatprep.subr.bf16.mxu0 0
        %1213 = vmatpush2.bf16.msra.mxu0 0
        %1214 = vmatprep.subr.bf16.mxu0 0
        %1215 = vmatpush2.bf16.msra.mxu0 0
        %1216 = vmatprep.subr.bf16.mxu0 0
        %1217 = vmatpush2.bf16.msra.mxu0 0
        %1218 = vmatprep.subr.bf16.mxu0 0
        %1219 = vmatpush2.bf16.msra.mxu0 0
        %1220 = vmatprep.subr.bf16.mxu0 0
        %1221 = vmatpush2.bf16.msra.mxu0 0
        %1222 = vmatprep.subr.bf16.mxu0 0
        %1223 = vmatpush2.bf16.msra.mxu0 0
        %1224 = vmatprep.subr.bf16.mxu0 0
        %1225 = vmatpush2.bf16.msra.mxu0 0
        %1226 = vmatprep.mubr.bf16.mxu0 0
        %1227 = vmatmul.mubr.bf16.gmra.mxu0 %v296
        %v1228 = vpop.f32.mrf.mxu0
        %v1229 = vadd.f32 0.0, %v1228
        %v1230 = vpop.f32.mrf.mxu0
        %v1231 = vpop.f32.mrf.mxu0
        %v1232 = vpop.f32.mrf.mxu0
        %1233 = vdwg.mxu0
        %v1238 = vunpack.c.l.b16 %v1154
        %v1239 = vunpack.c.l.b16 %v1155
        %v1240 = vunpack.c.l.b16 %v1156
        %v1241 = vunpack.c.l.b16 %v1157
        %v1242 = vpack.c.b16 %v1239, %v1238
        %v1243 = vpack.c.b16 %v1241, %v1240
        %1246 = vmatprep.subr.bf16.mxu0 0
        %1247 = vmatpush1.bf16.msra.mxu0 0
        %1248 = vmatprep.subr.bf16.mxu0 0
        %1249 = vmatpush1.bf16.msra.mxu0 0
        %1250 = vmatprep.subr.bf16.mxu0 0
        %1251 = vmatpush1.bf16.msra.mxu0 0
        %1252 = vmatprep.subr.bf16.mxu0 0
        %1253 = vmatpush1.bf16.msra.mxu0 0
        %1254 = vmatprep.subr.bf16.mxu0 0
        %1255 = vmatpush1.bf16.msra.mxu0 0
        %1256 = vmatprep.subr.bf16.mxu0 0
        %1257 = vmatpush1.bf16.msra.mxu0 0
        %1258 = vmatprep.subr.bf16.mxu0 0
        %1259 = vmatpush1.bf16.msra.mxu0 %v1243
        %1260 = vmatprep.subr.bf16.mxu0 0
        %1261 = vmatpush1.bf16.msra.mxu0 %v1242
        %1262 = vmatprep.subr.bf16.mxu0 0
        %1263 = vmatpush2.bf16.msra.mxu0 0
        %1264 = vmatprep.subr.bf16.mxu0 0
        %1265 = vmatpush2.bf16.msra.mxu0 0
        %1266 = vmatprep.subr.bf16.mxu0 0
        %1267 = vmatpush2.bf16.msra.mxu0 0
        %1268 = vmatprep.subr.bf16.mxu0 0
        %1269 = vmatpush2.bf16.msra.mxu0 0
        %1270 = vmatprep.subr.bf16.mxu0 0
        %1271 = vmatpush2.bf16.msra.mxu0 0
        %1272 = vmatprep.subr.bf16.mxu0 0
        %1273 = vmatpush2.bf16.msra.mxu0 0
        %1274 = vmatprep.subr.bf16.mxu0 0
        %1275 = vmatpush2.bf16.msra.mxu0 0
        %1276 = vmatprep.subr.bf16.mxu0 0
        %1277 = vmatpush2.bf16.msra.mxu0 0
        %1278 = vmatprep.mubr.bf16.mxu0 0
        %1279 = vmatmul.mubr.bf16.gmra.mxu0 %v296
        %v1280 = vpop.f32.mrf.mxu0
        %v1281 = vadd.f32 0.0, %v1280
        %v1282 = vpop.f32.mrf.mxu0
        %v1283 = vpop.f32.mrf.mxu0
        %v1284 = vpop.f32.mrf.mxu0
        %1285 = vdwg.mxu0
        %v1290 = vunpack.c.l.b16 %v1158
        %v1291 = vunpack.c.l.b16 %v1159
        %v1292 = vunpack.c.l.b16 %v1160
        %v1293 = vunpack.c.l.b16 %v1161
        %v1294 = vpack.c.b16 %v1291, %v1290
        %v1295 = vpack.c.b16 %v1293, %v1292
        %1298 = vmatprep.subr.bf16.mxu0 0
        %1299 = vmatpush1.bf16.msra.mxu0 0
        %1300 = vmatprep.subr.bf16.mxu0 0
        %1301 = vmatpush1.bf16.msra.mxu0 0
        %1302 = vmatprep.subr.bf16.mxu0 0
        %1303 = vmatpush1.bf16.msra.mxu0 0
        %1304 = vmatprep.subr.bf16.mxu0 0
        %1305 = vmatpush1.bf16.msra.mxu0 0
        %1306 = vmatprep.subr.bf16.mxu0 0
        %1307 = vmatpush1.bf16.msra.mxu0 0
        %1308 = vmatprep.subr.bf16.mxu0 0
        %1309 = vmatpush1.bf16.msra.mxu0 0
        %1310 = vmatprep.subr.bf16.mxu0 0
        %1311 = vmatpush1.bf16.msra.mxu0 %v1295
        %1312 = vmatprep.subr.bf16.mxu0 0
        %1313 = vmatpush1.bf16.msra.mxu0 %v1294
        %1314 = vmatprep.subr.bf16.mxu0 0
        %1315 = vmatpush2.bf16.msra.mxu0 0
        %1316 = vmatprep.subr.bf16.mxu0 0
        %1317 = vmatpush2.bf16.msra.mxu0 0
        %1318 = vmatprep.subr.bf16.mxu0 0
        %1319 = vmatpush2.bf16.msra.mxu0 0
        %1320 = vmatprep.subr.bf16.mxu0 0
        %1321 = vmatpush2.bf16.msra.mxu0 0
        %1322 = vmatprep.subr.bf16.mxu0 0
        %1323 = vmatpush2.bf16.msra.mxu0 0
        %1324 = vmatprep.subr.bf16.mxu0 0
        %1325 = vmatpush2.bf16.msra.mxu0 0
        %1326 = vmatprep.subr.bf16.mxu0 0
        %1327 = vmatpush2.bf16.msra.mxu0 0
        %1328 = vmatprep.subr.bf16.mxu0 0
        %1329 = vmatpush2.bf16.msra.mxu0 0
        %1330 = vmatprep.mubr.bf16.mxu0 0
        %1331 = vmatmul.mubr.bf16.gmra.mxu0 %v296
        %v1332 = vpop.f32.mrf.mxu0
        %v1333 = vadd.f32 0.0, %v1332
        %v1334 = vpop.f32.mrf.mxu0
        %v1335 = vpop.f32.mrf.mxu0
        %v1336 = vpop.f32.mrf.mxu0
        %1337 = vdwg.mxu0
        %v1342 = vunpack.c.l.b16 %v1162
        %v1343 = vunpack.c.l.b16 %v1163
        %v1344 = vunpack.c.l.b16 %v1164
        %v1345 = vunpack.c.l.b16 %v1165
        %v1346 = vpack.c.b16 %v1343, %v1342
        %v1347 = vpack.c.b16 %v1345, %v1344
        %1350 = vmatprep.subr.bf16.mxu0 0
        %1351 = vmatpush1.bf16.msra.mxu0 0
        %1352 = vmatprep.subr.bf16.mxu0 0
        %1353 = vmatpush1.bf16.msra.mxu0 0
        %1354 = vmatprep.subr.bf16.mxu0 0
        %1355 = vmatpush1.bf16.msra.mxu0 0
        %1356 = vmatprep.subr.bf16.mxu0 0
        %1357 = vmatpush1.bf16.msra.mxu0 0
        %1358 = vmatprep.subr.bf16.mxu0 0
        %1359 = vmatpush1.bf16.msra.mxu0 0
        %1360 = vmatprep.subr.bf16.mxu0 0
        %1361 = vmatpush1.bf16.msra.mxu0 0
        %1362 = vmatprep.subr.bf16.mxu0 0
        %1363 = vmatpush1.bf16.msra.mxu0 %v1347
        %1364 = vmatprep.subr.bf16.mxu0 0
        %1365 = vmatpush1.bf16.msra.mxu0 %v1346
        %1366 = vmatprep.subr.bf16.mxu0 0
        %1367 = vmatpush2.bf16.msra.mxu0 0
        %1368 = vmatprep.subr.bf16.mxu0 0
        %1369 = vmatpush2.bf16.msra.mxu0 0
        %1370 = vmatprep.subr.bf16.mxu0 0
        %1371 = vmatpush2.bf16.msra.mxu0 0
        %1372 = vmatprep.subr.bf16.mxu0 0
        %1373 = vmatpush2.bf16.msra.mxu0 0
        %1374 = vmatprep.subr.bf16.mxu0 0
        %1375 = vmatpush2.bf16.msra.mxu0 0
        %1376 = vmatprep.subr.bf16.mxu0 0
        %1377 = vmatpush2.bf16.msra.mxu0 0
        %1378 = vmatprep.subr.bf16.mxu0 0
        %1379 = vmatpush2.bf16.msra.mxu0 0
        %1380 = vmatprep.subr.bf16.mxu0 0
        %1381 = vmatpush2.bf16.msra.mxu0 0
        %1382 = vmatprep.mubr.bf16.mxu0 0
        %1383 = vmatmul.mubr.bf16.gmra.mxu0 %v296
        %v1384 = vpop.f32.mrf.mxu0
        %v1385 = vadd.f32 0.0, %v1384
        %v1386 = vpop.f32.mrf.mxu0
        %v1387 = vpop.f32.mrf.mxu0
        %v1388 = vpop.f32.mrf.mxu0
        %1389 = vdwg.mxu0
        %v1394 = vunpack.c.l.b16 %v1166
        %v1395 = vunpack.c.l.b16 %v1167
        %v1396 = vunpack.c.l.b16 %v1168
        %v1397 = vunpack.c.l.b16 %v1169
        %v1398 = vpack.c.b16 %v1395, %v1394
        %v1399 = vpack.c.b16 %v1397, %v1396
        %1402 = vmatprep.subr.bf16.mxu0 0
        %1403 = vmatpush1.bf16.msra.mxu0 0
        %1404 = vmatprep.subr.bf16.mxu0 0
        %1405 = vmatpush1.bf16.msra.mxu0 0
        %1406 = vmatprep.subr.bf16.mxu0 0
        %1407 = vmatpush1.bf16.msra.mxu0 0
        %1408 = vmatprep.subr.bf16.mxu0 0
        %1409 = vmatpush1.bf16.msra.mxu0 0
        %1410 = vmatprep.subr.bf16.mxu0 0
        %1411 = vmatpush1.bf16.msra.mxu0 0
        %1412 = vmatprep.subr.bf16.mxu0 0
        %1413 = vmatpush1.bf16.msra.mxu0 0
        %1414 = vmatprep.subr.bf16.mxu0 0
        %1415 = vmatpush1.bf16.msra.mxu0 %v1399
        %1416 = vmatprep.subr.bf16.mxu0 0
        %1417 = vmatpush1.bf16.msra.mxu0 %v1398
        %1418 = vmatprep.subr.bf16.mxu0 0
        %1419 = vmatpush2.bf16.msra.mxu0 0
        %1420 = vmatprep.subr.bf16.mxu0 0
        %1421 = vmatpush2.bf16.msra.mxu0 0
        %1422 = vmatprep.subr.bf16.mxu0 0
        %1423 = vmatpush2.bf16.msra.mxu0 0
        %1424 = vmatprep.subr.bf16.mxu0 0
        %1425 = vmatpush2.bf16.msra.mxu0 0
        %1426 = vmatprep.subr.bf16.mxu0 0
        %1427 = vmatpush2.bf16.msra.mxu0 0
        %1428 = vmatprep.subr.bf16.mxu0 0
        %1429 = vmatpush2.bf16.msra.mxu0 0
        %1430 = vmatprep.subr.bf16.mxu0 0
        %1431 = vmatpush2.bf16.msra.mxu0 0
        %1432 = vmatprep.subr.bf16.mxu0 0
        %1433 = vmatpush2.bf16.msra.mxu0 0
        %1434 = vmatprep.mubr.bf16.mxu0 0
        %1435 = vmatmul.mubr.bf16.gmra.mxu0 %v296
        %v1436 = vpop.f32.mrf.mxu0
        %v1437 = vadd.f32 0.0, %v1436
        %v1438 = vpop.f32.mrf.mxu0
        %v1439 = vpop.f32.mrf.mxu0
        %v1440 = vpop.f32.mrf.mxu0
        %1441 = vdwg.mxu0
        %v1446 = vunpack.c.l.b16 %v1170
        %v1447 = vunpack.c.l.b16 %v1171
        %v1448 = vunpack.c.l.b16 %v1172
        %v1449 = vunpack.c.l.b16 %v1173
        %v1450 = vpack.c.b16 %v1447, %v1446
        %v1451 = vpack.c.b16 %v1449, %v1448
        %1454 = vmatprep.subr.bf16.mxu0 0
        %1455 = vmatpush1.bf16.msra.mxu0 0
        %1456 = vmatprep.subr.bf16.mxu0 0
        %1457 = vmatpush1.bf16.msra.mxu0 0
        %1458 = vmatprep.subr.bf16.mxu0 0
        %1459 = vmatpush1.bf16.msra.mxu0 0
        %1460 = vmatprep.subr.bf16.mxu0 0
        %1461 = vmatpush1.bf16.msra.mxu0 0
        %1462 = vmatprep.subr.bf16.mxu0 0
        %1463 = vmatpush1.bf16.msra.mxu0 0
        %1464 = vmatprep.subr.bf16.mxu0 0
        %1465 = vmatpush1.bf16.msra.mxu0 0
        %1466 = vmatprep.subr.bf16.mxu0 0
        %1467 = vmatpush1.bf16.msra.mxu0 %v1451
        %1468 = vmatprep.subr.bf16.mxu0 0
        %1469 = vmatpush1.bf16.msra.mxu0 %v1450
        %1470 = vmatprep.subr.bf16.mxu0 0
        %1471 = vmatpush2.bf16.msra.mxu0 0
        %1472 = vmatprep.subr.bf16.mxu0 0
        %1473 = vmatpush2.bf16.msra.mxu0 0
        %1474 = vmatprep.subr.bf16.mxu0 0
        %1475 = vmatpush2.bf16.msra.mxu0 0
        %1476 = vmatprep.subr.bf16.mxu0 0
        %1477 = vmatpush2.bf16.msra.mxu0 0
        %1478 = vmatprep.subr.bf16.mxu0 0
        %1479 = vmatpush2.bf16.msra.mxu0 0
        %1480 = vmatprep.subr.bf16.mxu0 0
        %1481 = vmatpush2.bf16.msra.mxu0 0
        %1482 = vmatprep.subr.bf16.mxu0 0
        %1483 = vmatpush2.bf16.msra.mxu0 0
        %1484 = vmatprep.subr.bf16.mxu0 0
        %1485 = vmatpush2.bf16.msra.mxu0 0
        %1486 = vmatprep.mubr.bf16.mxu0 0
        %1487 = vmatmul.mubr.bf16.gmra.mxu0 %v296
        %v1488 = vpop.f32.mrf.mxu0
        %v1489 = vadd.f32 0.0, %v1488
        %v1490 = vpop.f32.mrf.mxu0
        %v1491 = vpop.f32.mrf.mxu0
        %v1492 = vpop.f32.mrf.mxu0
        %1493 = vdwg.mxu0
        %v1498 = vunpack.c.l.b16 %v1174
        %v1499 = vunpack.c.l.b16 %v1175
        %v1500 = vunpack.c.l.b16 %v1176
        %v1501 = vunpack.c.l.b16 %v1177
        %v1502 = vpack.c.b16 %v1499, %v1498
        %v1503 = vpack.c.b16 %v1501, %v1500
        %1506 = vmatprep.subr.bf16.mxu0 0
        %1507 = vmatpush1.bf16.msra.mxu0 0
        %1508 = vmatprep.subr.bf16.mxu0 0
        %1509 = vmatpush1.bf16.msra.mxu0 0
        %1510 = vmatprep.subr.bf16.mxu0 0
        %1511 = vmatpush1.bf16.msra.mxu0 0
        %1512 = vmatprep.subr.bf16.mxu0 0
        %1513 = vmatpush1.bf16.msra.mxu0 0
        %1514 = vmatprep.subr.bf16.mxu0 0
        %1515 = vmatpush1.bf16.msra.mxu0 0
        %1516 = vmatprep.subr.bf16.mxu0 0
        %1517 = vmatpush1.bf16.msra.mxu0 0
        %1518 = vmatprep.subr.bf16.mxu0 0
        %1519 = vmatpush1.bf16.msra.mxu0 %v1503
        %1520 = vmatprep.subr.bf16.mxu0 0
        %1521 = vmatpush1.bf16.msra.mxu0 %v1502
        %1522 = vmatprep.subr.bf16.mxu0 0
        %1523 = vmatpush2.bf16.msra.mxu0 0
        %1524 = vmatprep.subr.bf16.mxu0 0
        %1525 = vmatpush2.bf16.msra.mxu0 0
        %1526 = vmatprep.subr.bf16.mxu0 0
        %1527 = vmatpush2.bf16.msra.mxu0 0
        %1528 = vmatprep.subr.bf16.mxu0 0
        %1529 = vmatpush2.bf16.msra.mxu0 0
        %1530 = vmatprep.subr.bf16.mxu0 0
        %1531 = vmatpush2.bf16.msra.mxu0 0
        %1532 = vmatprep.subr.bf16.mxu0 0
        %1533 = vmatpush2.bf16.msra.mxu0 0
        %1534 = vmatprep.subr.bf16.mxu0 0
        %1535 = vmatpush2.bf16.msra.mxu0 0
        %1536 = vmatprep.subr.bf16.mxu0 0
        %1537 = vmatpush2.bf16.msra.mxu0 0
        %1538 = vmatprep.mubr.bf16.mxu0 0
        %1539 = vmatmul.mubr.bf16.gmra.mxu0 %v296
        %v1540 = vpop.f32.mrf.mxu0
        %v1541 = vadd.f32 0.0, %v1540
        %v1542 = vpop.f32.mrf.mxu0
        %v1543 = vpop.f32.mrf.mxu0
        %v1544 = vpop.f32.mrf.mxu0
        %1545 = vdwg.mxu0
        %v1550 = vunpack.c.l.b16 %v1178
        %v1551 = vunpack.c.l.b16 %v1179
        %v1552 = vunpack.c.l.b16 %v1180
        %v1553 = vunpack.c.l.b16 %v1181
        %v1554 = vpack.c.b16 %v1551, %v1550
        %v1555 = vpack.c.b16 %v1553, %v1552
        %1558 = vmatprep.subr.bf16.mxu0 0
        %1559 = vmatpush1.bf16.msra.mxu0 0
        %1560 = vmatprep.subr.bf16.mxu0 0
        %1561 = vmatpush1.bf16.msra.mxu0 0
        %1562 = vmatprep.subr.bf16.mxu0 0
        %1563 = vmatpush1.bf16.msra.mxu0 0
        %1564 = vmatprep.subr.bf16.mxu0 0
        %1565 = vmatpush1.bf16.msra.mxu0 0
        %1566 = vmatprep.subr.bf16.mxu0 0
        %1567 = vmatpush1.bf16.msra.mxu0 0
        %1568 = vmatprep.subr.bf16.mxu0 0
        %1569 = vmatpush1.bf16.msra.mxu0 0
        %1570 = vmatprep.subr.bf16.mxu0 0
        %1571 = vmatpush1.bf16.msra.mxu0 %v1555
        %1572 = vmatprep.subr.bf16.mxu0 0
        %1573 = vmatpush1.bf16.msra.mxu0 %v1554
        %1574 = vmatprep.subr.bf16.mxu0 0
        %1575 = vmatpush2.bf16.msra.mxu0 0
        %1576 = vmatprep.subr.bf16.mxu0 0
        %1577 = vmatpush2.bf16.msra.mxu0 0
        %1578 = vmatprep.subr.bf16.mxu0 0
        %1579 = vmatpush2.bf16.msra.mxu0 0
        %1580 = vmatprep.subr.bf16.mxu0 0
        %1581 = vmatpush2.bf16.msra.mxu0 0
        %1582 = vmatprep.subr.bf16.mxu0 0
        %1583 = vmatpush2.bf16.msra.mxu0 0
        %1584 = vmatprep.subr.bf16.mxu0 0
        %1585 = vmatpush2.bf16.msra.mxu0 0
        %1586 = vmatprep.subr.bf16.mxu0 0
        %1587 = vmatpush2.bf16.msra.mxu0 0
        %1588 = vmatprep.subr.bf16.mxu0 0
        %1589 = vmatpush2.bf16.msra.mxu0 0
        %1590 = vmatprep.mubr.bf16.mxu0 0
        %1591 = vmatmul.mubr.bf16.gmra.mxu0 %v296
        %v1592 = vpop.f32.mrf.mxu0
        %v1593 = vadd.f32 0.0, %v1592
        %v1594 = vpop.f32.mrf.mxu0
        %v1595 = vpop.f32.mrf.mxu0
        %v1596 = vpop.f32.mrf.mxu0
        %1597 = vdwg.mxu0
        %v1598 = vpack.c.bf16 %v333, %v333
        %v1599 = vpack.c.bf16 %v385, %v385
        %v1600 = vpack.c.bf16 %v437, %v437
        %v1601 = vpack.c.bf16 %v489, %v489
        %v1602 = vpack.c.bf16 %v541, %v541
        %v1603 = vpack.c.bf16 %v593, %v593
        %v1604 = vpack.c.bf16 %v645, %v645
        %v1605 = vpack.c.bf16 %v697, %v697
        %v1606 = vpack.c.bf16 %v781, %v781
        %v1607 = vpack.c.bf16 %v833, %v833
        %v1608 = vpack.c.bf16 %v885, %v885
        %v1609 = vpack.c.bf16 %v937, %v937
        %v1610 = vpack.c.bf16 %v989, %v989
        %v1611 = vpack.c.bf16 %v1041, %v1041
        %v1612 = vpack.c.bf16 %v1093, %v1093
        %v1613 = vpack.c.bf16 %v1145, %v1145
        %vm1614 = vcmask 523264
        %v1616 = vsel %vm1614, %v1598, 0
        %v1619 = vsel %vm1614, %v1606, 0
        %1621 = vmatprep.subr.bf16.mxu0 0
        %1622 = vmatpush1.bf16.xpose.msra.mxu0 0
        %1623 = vmatprep.subr.bf16.mxu0 0
        %1624 = vmatpush1.bf16.xpose.msra.mxu0 0
        %1625 = vmatprep.subr.bf16.mxu0 0
        %1626 = vmatpush1.bf16.xpose.msra.mxu0 0
        %1627 = vmatprep.subr.bf16.mxu0 0
        %1628 = vmatpush1.bf16.xpose.msra.mxu0 0
        %1629 = vmatprep.subr.bf16.mxu0 0
        %1630 = vmatpush1.bf16.xpose.msra.mxu0 0
        %1631 = vmatprep.subr.bf16.mxu0 0
        %1632 = vmatpush1.bf16.xpose.msra.mxu0 0
        %1633 = vmatprep.subr.bf16.mxu0 0
        %1634 = vmatpush1.bf16.xpose.msra.mxu0 0
        %1635 = vmatprep.subr.bf16.mxu0 0
        %1636 = vmatpush1.bf16.xpose.msra.mxu0 %v1619
        %1637 = vmatprep.subr.bf16.mxu0 0
        %1638 = vmatpush2.bf16.xpose.msra.mxu0 0
        %1639 = vmatprep.subr.bf16.mxu0 0
        %1640 = vmatpush2.bf16.xpose.msra.mxu0 0
        %1641 = vmatprep.subr.bf16.mxu0 0
        %1642 = vmatpush2.bf16.xpose.msra.mxu0 0
        %1643 = vmatprep.subr.bf16.mxu0 0
        %1644 = vmatpush2.bf16.xpose.msra.mxu0 0
        %1645 = vmatprep.subr.bf16.mxu0 0
        %1646 = vmatpush2.bf16.xpose.msra.mxu0 0
        %1647 = vmatprep.subr.bf16.mxu0 0
        %1648 = vmatpush2.bf16.xpose.msra.mxu0 0
        %1649 = vmatprep.subr.bf16.mxu0 0
        %1650 = vmatpush2.bf16.xpose.msra.mxu0 0
        %1651 = vmatprep.subr.bf16.mxu0 0
        %1652 = vmatpush2.bf16.xpose.msra.mxu0 0
        %1653 = vmatprep.mubr.bf16.mxu0 0
        %1654 = vmatmul.mubr.bf16.gmra.mxu0 %v1616
        %v1655 = vpop.f32.mrf.mxu0
        %v1656 = vadd.f32 0.0, %v1655
        %v1657 = vpop.f32.mrf.mxu0
        %v1658 = vpop.f32.mrf.mxu0
        %v1659 = vpop.f32.mrf.mxu0
        %1660 = vdwg.mxu0
        %v1662 = vsel %vm1614, %v1599, 0
        %v1665 = vsel %vm1614, %v1607, 0
        %1667 = vmatprep.subr.bf16.mxu0 0
        %1668 = vmatpush1.bf16.xpose.msra.mxu0 0
        %1669 = vmatprep.subr.bf16.mxu0 0
        %1670 = vmatpush1.bf16.xpose.msra.mxu0 0
        %1671 = vmatprep.subr.bf16.mxu0 0
        %1672 = vmatpush1.bf16.xpose.msra.mxu0 0
        %1673 = vmatprep.subr.bf16.mxu0 0
        %1674 = vmatpush1.bf16.xpose.msra.mxu0 0
        %1675 = vmatprep.subr.bf16.mxu0 0
        %1676 = vmatpush1.bf16.xpose.msra.mxu0 0
        %1677 = vmatprep.subr.bf16.mxu0 0
        %1678 = vmatpush1.bf16.xpose.msra.mxu0 0
        %1679 = vmatprep.subr.bf16.mxu0 0
        %1680 = vmatpush1.bf16.xpose.msra.mxu0 0
        %1681 = vmatprep.subr.bf16.mxu0 0
        %1682 = vmatpush1.bf16.xpose.msra.mxu0 %v1665
        %1683 = vmatprep.subr.bf16.mxu0 0
        %1684 = vmatpush2.bf16.xpose.msra.mxu0 0
        %1685 = vmatprep.subr.bf16.mxu0 0
        %1686 = vmatpush2.bf16.xpose.msra.mxu0 0
        %1687 = vmatprep.subr.bf16.mxu0 0
        %1688 = vmatpush2.bf16.xpose.msra.mxu0 0
        %1689 = vmatprep.subr.bf16.mxu0 0
        %1690 = vmatpush2.bf16.xpose.msra.mxu0 0
        %1691 = vmatprep.subr.bf16.mxu0 0
        %1692 = vmatpush2.bf16.xpose.msra.mxu0 0
        %1693 = vmatprep.subr.bf16.mxu0 0
        %1694 = vmatpush2.bf16.xpose.msra.mxu0 0
        %1695 = vmatprep.subr.bf16.mxu0 0
        %1696 = vmatpush2.bf16.xpose.msra.mxu0 0
        %1697 = vmatprep.subr.bf16.mxu0 0
        %1698 = vmatpush2.bf16.xpose.msra.mxu0 0
        %1699 = vmatprep.mubr.bf16.mxu0 0
        %1700 = vmatmul.mubr.bf16.gmra.mxu0 %v1662
        %v1701 = vpop.f32.mrf.mxu0
        %v1702 = vadd.f32 0.0, %v1701
        %v1703 = vpop.f32.mrf.mxu0
        %v1704 = vpop.f32.mrf.mxu0
        %v1705 = vpop.f32.mrf.mxu0
        %1706 = vdwg.mxu0
        %v1708 = vsel %vm1614, %v1600, 0
        %v1711 = vsel %vm1614, %v1608, 0
        %1713 = vmatprep.subr.bf16.mxu0 0
        %1714 = vmatpush1.bf16.xpose.msra.mxu0 0
        %1715 = vmatprep.subr.bf16.mxu0 0
        %1716 = vmatpush1.bf16.xpose.msra.mxu0 0
        %1717 = vmatprep.subr.bf16.mxu0 0
        %1718 = vmatpush1.bf16.xpose.msra.mxu0 0
        %1719 = vmatprep.subr.bf16.mxu0 0
        %1720 = vmatpush1.bf16.xpose.msra.mxu0 0
        %1721 = vmatprep.subr.bf16.mxu0 0
        %1722 = vmatpush1.bf16.xpose.msra.mxu0 0
        %1723 = vmatprep.subr.bf16.mxu0 0
        %1724 = vmatpush1.bf16.xpose.msra.mxu0 0
        %1725 = vmatprep.subr.bf16.mxu0 0
        %1726 = vmatpush1.bf16.xpose.msra.mxu0 0
        %1727 = vmatprep.subr.bf16.mxu0 0
        %1728 = vmatpush1.bf16.xpose.msra.mxu0 %v1711
        %1729 = vmatprep.subr.bf16.mxu0 0
        %1730 = vmatpush2.bf16.xpose.msra.mxu0 0
        %1731 = vmatprep.subr.bf16.mxu0 0
        %1732 = vmatpush2.bf16.xpose.msra.mxu0 0
        %1733 = vmatprep.subr.bf16.mxu0 0
        %1734 = vmatpush2.bf16.xpose.msra.mxu0 0
        %1735 = vmatprep.subr.bf16.mxu0 0
        %1736 = vmatpush2.bf16.xpose.msra.mxu0 0
        %1737 = vmatprep.subr.bf16.mxu0 0
        %1738 = vmatpush2.bf16.xpose.msra.mxu0 0
        %1739 = vmatprep.subr.bf16.mxu0 0
        %1740 = vmatpush2.bf16.xpose.msra.mxu0 0
        %1741 = vmatprep.subr.bf16.mxu0 0
        %1742 = vmatpush2.bf16.xpose.msra.mxu0 0
        %1743 = vmatprep.subr.bf16.mxu0 0
        %1744 = vmatpush2.bf16.xpose.msra.mxu0 0
        %1745 = vmatprep.mubr.bf16.mxu0 0
        %1746 = vmatmul.mubr.bf16.gmra.mxu0 %v1708
        %v1747 = vpop.f32.mrf.mxu0
        %v1748 = vadd.f32 0.0, %v1747
        %v1749 = vpop.f32.mrf.mxu0
        %v1750 = vpop.f32.mrf.mxu0
        %v1751 = vpop.f32.mrf.mxu0
        %1752 = vdwg.mxu0
        %v1754 = vsel %vm1614, %v1601, 0
        %v1757 = vsel %vm1614, %v1609, 0
        %1759 = vmatprep.subr.bf16.mxu0 0
        %1760 = vmatpush1.bf16.xpose.msra.mxu0 0
        %1761 = vmatprep.subr.bf16.mxu0 0
        %1762 = vmatpush1.bf16.xpose.msra.mxu0 0
        %1763 = vmatprep.subr.bf16.mxu0 0
        %1764 = vmatpush1.bf16.xpose.msra.mxu0 0
        %1765 = vmatprep.subr.bf16.mxu0 0
        %1766 = vmatpush1.bf16.xpose.msra.mxu0 0
        %1767 = vmatprep.subr.bf16.mxu0 0
        %1768 = vmatpush1.bf16.xpose.msra.mxu0 0
        %1769 = vmatprep.subr.bf16.mxu0 0
        %1770 = vmatpush1.bf16.xpose.msra.mxu0 0
        %1771 = vmatprep.subr.bf16.mxu0 0
        %1772 = vmatpush1.bf16.xpose.msra.mxu0 0
        %1773 = vmatprep.subr.bf16.mxu0 0
        %1774 = vmatpush1.bf16.xpose.msra.mxu0 %v1757
        %1775 = vmatprep.subr.bf16.mxu0 0
        %1776 = vmatpush2.bf16.xpose.msra.mxu0 0
        %1777 = vmatprep.subr.bf16.mxu0 0
        %1778 = vmatpush2.bf16.xpose.msra.mxu0 0
        %1779 = vmatprep.subr.bf16.mxu0 0
        %1780 = vmatpush2.bf16.xpose.msra.mxu0 0
        %1781 = vmatprep.subr.bf16.mxu0 0
        %1782 = vmatpush2.bf16.xpose.msra.mxu0 0
        %1783 = vmatprep.subr.bf16.mxu0 0
        %1784 = vmatpush2.bf16.xpose.msra.mxu0 0
        %1785 = vmatprep.subr.bf16.mxu0 0
        %1786 = vmatpush2.bf16.xpose.msra.mxu0 0
        %1787 = vmatprep.subr.bf16.mxu0 0
        %1788 = vmatpush2.bf16.xpose.msra.mxu0 0
        %1789 = vmatprep.subr.bf16.mxu0 0
        %1790 = vmatpush2.bf16.xpose.msra.mxu0 0
        %1791 = vmatprep.mubr.bf16.mxu0 0
        %1792 = vmatmul.mubr.bf16.gmra.mxu0 %v1754
        %v1793 = vpop.f32.mrf.mxu0
        %v1794 = vadd.f32 0.0, %v1793
        %v1795 = vpop.f32.mrf.mxu0
        %v1796 = vpop.f32.mrf.mxu0
        %v1797 = vpop.f32.mrf.mxu0
        %1798 = vdwg.mxu0
        %v1800 = vsel %vm1614, %v1602, 0
        %v1803 = vsel %vm1614, %v1610, 0
        %1805 = vmatprep.subr.bf16.mxu0 0
        %1806 = vmatpush1.bf16.xpose.msra.mxu0 0
        %1807 = vmatprep.subr.bf16.mxu0 0
        %1808 = vmatpush1.bf16.xpose.msra.mxu0 0
        %1809 = vmatprep.subr.bf16.mxu0 0
        %1810 = vmatpush1.bf16.xpose.msra.mxu0 0
        %1811 = vmatprep.subr.bf16.mxu0 0
        %1812 = vmatpush1.bf16.xpose.msra.mxu0 0
        %1813 = vmatprep.subr.bf16.mxu0 0
        %1814 = vmatpush1.bf16.xpose.msra.mxu0 0
        %1815 = vmatprep.subr.bf16.mxu0 0
        %1816 = vmatpush1.bf16.xpose.msra.mxu0 0
        %1817 = vmatprep.subr.bf16.mxu0 0
        %1818 = vmatpush1.bf16.xpose.msra.mxu0 0
        %1819 = vmatprep.subr.bf16.mxu0 0
        %1820 = vmatpush1.bf16.xpose.msra.mxu0 %v1803
        %1821 = vmatprep.subr.bf16.mxu0 0
        %1822 = vmatpush2.bf16.xpose.msra.mxu0 0
        %1823 = vmatprep.subr.bf16.mxu0 0
        %1824 = vmatpush2.bf16.xpose.msra.mxu0 0
        %1825 = vmatprep.subr.bf16.mxu0 0
        %1826 = vmatpush2.bf16.xpose.msra.mxu0 0
        %1827 = vmatprep.subr.bf16.mxu0 0
        %1828 = vmatpush2.bf16.xpose.msra.mxu0 0
        %1829 = vmatprep.subr.bf16.mxu0 0
        %1830 = vmatpush2.bf16.xpose.msra.mxu0 0
        %1831 = vmatprep.subr.bf16.mxu0 0
        %1832 = vmatpush2.bf16.xpose.msra.mxu0 0
        %1833 = vmatprep.subr.bf16.mxu0 0
        %1834 = vmatpush2.bf16.xpose.msra.mxu0 0
        %1835 = vmatprep.subr.bf16.mxu0 0
        %1836 = vmatpush2.bf16.xpose.msra.mxu0 0
        %1837 = vmatprep.mubr.bf16.mxu0 0
        %1838 = vmatmul.mubr.bf16.gmra.mxu0 %v1800
        %v1839 = vpop.f32.mrf.mxu0
        %v1840 = vadd.f32 0.0, %v1839
        %v1841 = vpop.f32.mrf.mxu0
        %v1842 = vpop.f32.mrf.mxu0
        %v1843 = vpop.f32.mrf.mxu0
        %1844 = vdwg.mxu0
        %v1846 = vsel %vm1614, %v1603, 0
        %v1849 = vsel %vm1614, %v1611, 0
        %1851 = vmatprep.subr.bf16.mxu0 0
        %1852 = vmatpush1.bf16.xpose.msra.mxu0 0
        %1853 = vmatprep.subr.bf16.mxu0 0
        %1854 = vmatpush1.bf16.xpose.msra.mxu0 0
        %1855 = vmatprep.subr.bf16.mxu0 0
        %1856 = vmatpush1.bf16.xpose.msra.mxu0 0
        %1857 = vmatprep.subr.bf16.mxu0 0
        %1858 = vmatpush1.bf16.xpose.msra.mxu0 0
        %1859 = vmatprep.subr.bf16.mxu0 0
        %1860 = vmatpush1.bf16.xpose.msra.mxu0 0
        %1861 = vmatprep.subr.bf16.mxu0 0
        %1862 = vmatpush1.bf16.xpose.msra.mxu0 0
        %1863 = vmatprep.subr.bf16.mxu0 0
        %1864 = vmatpush1.bf16.xpose.msra.mxu0 0
        %1865 = vmatprep.subr.bf16.mxu0 0
        %1866 = vmatpush1.bf16.xpose.msra.mxu0 %v1849
        %1867 = vmatprep.subr.bf16.mxu0 0
        %1868 = vmatpush2.bf16.xpose.msra.mxu0 0
        %1869 = vmatprep.subr.bf16.mxu0 0
        %1870 = vmatpush2.bf16.xpose.msra.mxu0 0
        %1871 = vmatprep.subr.bf16.mxu0 0
        %1872 = vmatpush2.bf16.xpose.msra.mxu0 0
        %1873 = vmatprep.subr.bf16.mxu0 0
        %1874 = vmatpush2.bf16.xpose.msra.mxu0 0
        %1875 = vmatprep.subr.bf16.mxu0 0
        %1876 = vmatpush2.bf16.xpose.msra.mxu0 0
        %1877 = vmatprep.subr.bf16.mxu0 0
        %1878 = vmatpush2.bf16.xpose.msra.mxu0 0
        %1879 = vmatprep.subr.bf16.mxu0 0
        %1880 = vmatpush2.bf16.xpose.msra.mxu0 0
        %1881 = vmatprep.subr.bf16.mxu0 0
        %1882 = vmatpush2.bf16.xpose.msra.mxu0 0
        %1883 = vmatprep.mubr.bf16.mxu0 0
        %1884 = vmatmul.mubr.bf16.gmra.mxu0 %v1846
        %v1885 = vpop.f32.mrf.mxu0
        %v1886 = vadd.f32 0.0, %v1885
        %v1887 = vpop.f32.mrf.mxu0
        %v1888 = vpop.f32.mrf.mxu0
        %v1889 = vpop.f32.mrf.mxu0
        %1890 = vdwg.mxu0
        %v1892 = vsel %vm1614, %v1604, 0
        %v1895 = vsel %vm1614, %v1612, 0
        %1897 = vmatprep.subr.bf16.mxu0 0
        %1898 = vmatpush1.bf16.xpose.msra.mxu0 0
        %1899 = vmatprep.subr.bf16.mxu0 0
        %1900 = vmatpush1.bf16.xpose.msra.mxu0 0
        %1901 = vmatprep.subr.bf16.mxu0 0
        %1902 = vmatpush1.bf16.xpose.msra.mxu0 0
        %1903 = vmatprep.subr.bf16.mxu0 0
        %1904 = vmatpush1.bf16.xpose.msra.mxu0 0
        %1905 = vmatprep.subr.bf16.mxu0 0
        %1906 = vmatpush1.bf16.xpose.msra.mxu0 0
        %1907 = vmatprep.subr.bf16.mxu0 0
        %1908 = vmatpush1.bf16.xpose.msra.mxu0 0
        %1909 = vmatprep.subr.bf16.mxu0 0
        %1910 = vmatpush1.bf16.xpose.msra.mxu0 0
        %1911 = vmatprep.subr.bf16.mxu0 0
        %1912 = vmatpush1.bf16.xpose.msra.mxu0 %v1895
        %1913 = vmatprep.subr.bf16.mxu0 0
        %1914 = vmatpush2.bf16.xpose.msra.mxu0 0
        %1915 = vmatprep.subr.bf16.mxu0 0
        %1916 = vmatpush2.bf16.xpose.msra.mxu0 0
        %1917 = vmatprep.subr.bf16.mxu0 0
        %1918 = vmatpush2.bf16.xpose.msra.mxu0 0
        %1919 = vmatprep.subr.bf16.mxu0 0
        %1920 = vmatpush2.bf16.xpose.msra.mxu0 0
        %1921 = vmatprep.subr.bf16.mxu0 0
        %1922 = vmatpush2.bf16.xpose.msra.mxu0 0
        %1923 = vmatprep.subr.bf16.mxu0 0
        %1924 = vmatpush2.bf16.xpose.msra.mxu0 0
        %1925 = vmatprep.subr.bf16.mxu0 0
        %1926 = vmatpush2.bf16.xpose.msra.mxu0 0
        %1927 = vmatprep.subr.bf16.mxu0 0
        %1928 = vmatpush2.bf16.xpose.msra.mxu0 0
        %1929 = vmatprep.mubr.bf16.mxu0 0
        %1930 = vmatmul.mubr.bf16.gmra.mxu0 %v1892
        %v1931 = vpop.f32.mrf.mxu0
        %v1932 = vadd.f32 0.0, %v1931
        %v1933 = vpop.f32.mrf.mxu0
        %v1934 = vpop.f32.mrf.mxu0
        %v1935 = vpop.f32.mrf.mxu0
        %1936 = vdwg.mxu0
        %v1938 = vsel %vm1614, %v1605, 0
        %v1941 = vsel %vm1614, %v1613, 0
        %1943 = vmatprep.subr.bf16.mxu0 0
        %1944 = vmatpush1.bf16.xpose.msra.mxu0 0
        %1945 = vmatprep.subr.bf16.mxu0 0
        %1946 = vmatpush1.bf16.xpose.msra.mxu0 0
        %1947 = vmatprep.subr.bf16.mxu0 0
        %1948 = vmatpush1.bf16.xpose.msra.mxu0 0
        %1949 = vmatprep.subr.bf16.mxu0 0
        %1950 = vmatpush1.bf16.xpose.msra.mxu0 0
        %1951 = vmatprep.subr.bf16.mxu0 0
        %1952 = vmatpush1.bf16.xpose.msra.mxu0 0
        %1953 = vmatprep.subr.bf16.mxu0 0
        %1954 = vmatpush1.bf16.xpose.msra.mxu0 0
        %1955 = vmatprep.subr.bf16.mxu0 0
        %1956 = vmatpush1.bf16.xpose.msra.mxu0 0
        %1957 = vmatprep.subr.bf16.mxu0 0
        %1958 = vmatpush1.bf16.xpose.msra.mxu0 %v1941
        %1959 = vmatprep.subr.bf16.mxu0 0
        %1960 = vmatpush2.bf16.xpose.msra.mxu0 0
        %1961 = vmatprep.subr.bf16.mxu0 0
        %1962 = vmatpush2.bf16.xpose.msra.mxu0 0
        %1963 = vmatprep.subr.bf16.mxu0 0
        %1964 = vmatpush2.bf16.xpose.msra.mxu0 0
        %1965 = vmatprep.subr.bf16.mxu0 0
        %1966 = vmatpush2.bf16.xpose.msra.mxu0 0
        %1967 = vmatprep.subr.bf16.mxu0 0
        %1968 = vmatpush2.bf16.xpose.msra.mxu0 0
        %1969 = vmatprep.subr.bf16.mxu0 0
        %1970 = vmatpush2.bf16.xpose.msra.mxu0 0
        %1971 = vmatprep.subr.bf16.mxu0 0
        %1972 = vmatpush2.bf16.xpose.msra.mxu0 0
        %1973 = vmatprep.subr.bf16.mxu0 0
        %1974 = vmatpush2.bf16.xpose.msra.mxu0 0
        %1975 = vmatprep.mubr.bf16.mxu0 0
        %1976 = vmatmul.mubr.bf16.gmra.mxu0 %v1938
        %v1977 = vpop.f32.mrf.mxu0
        %v1978 = vadd.f32 0.0, %v1977
        %v1979 = vpop.f32.mrf.mxu0
        %v1980 = vpop.f32.mrf.mxu0
        %v1981 = vpop.f32.mrf.mxu0
        %1982 = vdwg.mxu0
        %vm1983 = vcmask 64512
        %v1984 = vsel %vm1983, %v1656, -inf
        %1985 = vmax.xlane.f32.xlu0 %v1984
        %v1986 = vpop.xlane.xlu0 %1985
        %v1987 = vsel %vm1983, %v1702, -inf
        %1988 = vmax.xlane.f32.xlu0 %v1987
        %v1989 = vpop.xlane.xlu0 %1988
        %v1990 = vsel %vm1983, %v1748, -inf
        %1991 = vmax.xlane.f32.xlu0 %v1990
        %v1992 = vpop.xlane.xlu0 %1991
        %v1993 = vsel %vm1983, %v1794, -inf
        %1994 = vmax.xlane.f32.xlu0 %v1993
        %v1995 = vpop.xlane.xlu0 %1994
        %v1996 = vsel %vm1983, %v1840, -inf
        %1997 = vmax.xlane.f32.xlu0 %v1996
        %v1998 = vpop.xlane.xlu0 %1997
        %v1999 = vsel %vm1983, %v1886, -inf
        %2000 = vmax.xlane.f32.xlu0 %v1999
        %v2001 = vpop.xlane.xlu0 %2000
        %v2002 = vsel %vm1983, %v1932, -inf
        %2003 = vmax.xlane.f32.xlu0 %v2002
        %v2004 = vpop.xlane.xlu0 %2003
        %v2005 = vsel %vm1983, %v1978, -inf
        %2006 = vmax.xlane.f32.xlu0 %v2005
        %v2007 = vpop.xlane.xlu0 %2006
        %v2008 = vsub.f32 %v1656, %v1986
        %v2009 = vsub.f32 %v1702, %v1989
        %v2010 = vsub.f32 %v1748, %v1992
        %v2011 = vsub.f32 %v1794, %v1995
        %v2012 = vsub.f32 %v1840, %v1998
        %v2013 = vsub.f32 %v1886, %v2001
        %v2014 = vsub.f32 %v1932, %v2004
        %v2015 = vsub.f32 %v1978, %v2007
        %v2016 = vmul.f32 %v2008, 1.442695
        %v2017 = vpow.pop %v2016
        %v2018 = vmul.f32 %v2009, 1.442695
        %v2019 = vpow.pop %v2018
        %v2020 = vmul.f32 %v2010, 1.442695
        %v2021 = vpow.pop %v2020
        %v2022 = vmul.f32 %v2011, 1.442695
        %v2023 = vpow.pop %v2022
        %v2024 = vmul.f32 %v2012, 1.442695
        %v2025 = vpow.pop %v2024
        %v2026 = vmul.f32 %v2013, 1.442695
        %v2027 = vpow.pop %v2026
        %v2028 = vmul.f32 %v2014, 1.442695
        %v2029 = vpow.pop %v2028
        %v2030 = vmul.f32 %v2015, 1.442695
        %v2031 = vpow.pop %v2030
        %v2032 = vsel %vm1983, %v2017, 0.0
        %2033 = vadd.xlane.f32.xlu0 %v2032
        %v2034 = vpop.xlane.xlu0 %2033
        %v2035 = vsel %vm1983, %v2019, 0.0
        %2036 = vadd.xlane.f32.xlu0 %v2035
        %v2037 = vpop.xlane.xlu0 %2036
        %v2038 = vsel %vm1983, %v2021, 0.0
        %2039 = vadd.xlane.f32.xlu0 %v2038
        %v2040 = vpop.xlane.xlu0 %2039
        %v2041 = vsel %vm1983, %v2023, 0.0
        %2042 = vadd.xlane.f32.xlu0 %v2041
        %v2043 = vpop.xlane.xlu0 %2042
        %v2044 = vsel %vm1983, %v2025, 0.0
        %2045 = vadd.xlane.f32.xlu0 %v2044
        %v2046 = vpop.xlane.xlu0 %2045
        %v2047 = vsel %vm1983, %v2027, 0.0
        %2048 = vadd.xlane.f32.xlu0 %v2047
        %v2049 = vpop.xlane.xlu0 %2048
        %v2050 = vsel %vm1983, %v2029, 0.0
        %2051 = vadd.xlane.f32.xlu0 %v2050
        %v2052 = vpop.xlane.xlu0 %2051
        %v2053 = vsel %vm1983, %v2031, 0.0
        %2054 = vadd.xlane.f32.xlu0 %v2053
        %v2055 = vpop.xlane.xlu0 %2054
        %v2056 = vrcp.pop %v2034
        %v2057 = vrcp.pop %v2037
        %v2058 = vrcp.pop %v2040
        %v2059 = vrcp.pop %v2043
        %v2060 = vrcp.pop %v2046
        %v2061 = vrcp.pop %v2049
        %v2062 = vrcp.pop %v2052
        %v2063 = vrcp.pop %v2055
        %v2064 = vmul.f32 %v2017, %v2056
        %v2065 = vmul.f32 %v2019, %v2057
        %v2066 = vmul.f32 %v2021, %v2058
        %v2067 = vmul.f32 %v2023, %v2059
        %v2068 = vmul.f32 %v2025, %v2060
        %v2069 = vmul.f32 %v2027, %v2061
        %v2070 = vmul.f32 %v2029, %v2062
        %v2071 = vmul.f32 %v2031, %v2063
        %v2072 = vpack.c.bf16 %v2064, %v2064
        %v2073 = vpack.c.bf16 %v2065, %v2065
        %v2074 = vpack.c.bf16 %v2066, %v2066
        %v2075 = vpack.c.bf16 %v2067, %v2067
        %v2076 = vpack.c.bf16 %v2068, %v2068
        %v2077 = vpack.c.bf16 %v2069, %v2069
        %v2078 = vpack.c.bf16 %v2070, %v2070
        %v2079 = vpack.c.bf16 %v2071, %v2071
        %v2080 = vpack.c.bf16 %v1229, %v1229
        %v2081 = vpack.c.bf16 %v1281, %v1281
        %v2082 = vpack.c.bf16 %v1333, %v1333
        %v2083 = vpack.c.bf16 %v1385, %v1385
        %v2084 = vpack.c.bf16 %v1437, %v1437
        %v2085 = vpack.c.bf16 %v1489, %v1489
        %v2086 = vpack.c.bf16 %v1541, %v1541
        %v2087 = vpack.c.bf16 %v1593, %v1593
        %v2089 = vsel %vm1983, %v2072, 0
        %vm2091 = vcmask 1043456
        %v2093 = vsel %vm2091, %v2080, 0
        %2095 = vmatprep.subr.bf16.mxu0 0
        %2096 = vmatpush1.bf16.msra.mxu0 0
        %2097 = vmatprep.subr.bf16.mxu0 0
        %2098 = vmatpush1.bf16.msra.mxu0 0
        %2099 = vmatprep.subr.bf16.mxu0 0
        %2100 = vmatpush1.bf16.msra.mxu0 0
        %2101 = vmatprep.subr.bf16.mxu0 0
        %2102 = vmatpush1.bf16.msra.mxu0 0
        %2103 = vmatprep.subr.bf16.mxu0 0
        %2104 = vmatpush1.bf16.msra.mxu0 0
        %2105 = vmatprep.subr.bf16.mxu0 0
        %2106 = vmatpush1.bf16.msra.mxu0 0
        %2107 = vmatprep.subr.bf16.mxu0 0
        %2108 = vmatpush1.bf16.msra.mxu0 0
        %2109 = vmatprep.subr.bf16.mxu0 0
        %2110 = vmatpush1.bf16.msra.mxu0 %v2093
        %2111 = vmatprep.subr.bf16.mxu0 0
        %2112 = vmatpush2.bf16.msra.mxu0 0
        %2113 = vmatprep.subr.bf16.mxu0 0
        %2114 = vmatpush2.bf16.msra.mxu0 0
        %2115 = vmatprep.subr.bf16.mxu0 0
        %2116 = vmatpush2.bf16.msra.mxu0 0
        %2117 = vmatprep.subr.bf16.mxu0 0
        %2118 = vmatpush2.bf16.msra.mxu0 0
        %2119 = vmatprep.subr.bf16.mxu0 0
        %2120 = vmatpush2.bf16.msra.mxu0 0
        %2121 = vmatprep.subr.bf16.mxu0 0
        %2122 = vmatpush2.bf16.msra.mxu0 0
        %2123 = vmatprep.subr.bf16.mxu0 0
        %2124 = vmatpush2.bf16.msra.mxu0 0
        %2125 = vmatprep.subr.bf16.mxu0 0
        %2126 = vmatpush2.bf16.msra.mxu0 0
        %2127 = vmatprep.mubr.bf16.mxu0 0
        %2128 = vmatmul.mubr.bf16.gmra.mxu0 %v2089
        %v2129 = vpop.f32.mrf.mxu0
        %v2130 = vadd.f32 0.0, %v2129
        %v2131 = vpop.f32.mrf.mxu0
        %v2132 = vpop.f32.mrf.mxu0
        %v2133 = vpop.f32.mrf.mxu0
        %2134 = vdwg.mxu0
        %v2136 = vsel %vm1983, %v2073, 0
        %v2139 = vsel %vm2091, %v2081, 0
        %2141 = vmatprep.subr.bf16.mxu0 0
        %2142 = vmatpush1.bf16.msra.mxu0 0
        %2143 = vmatprep.subr.bf16.mxu0 0
        %2144 = vmatpush1.bf16.msra.mxu0 0
        %2145 = vmatprep.subr.bf16.mxu0 0
        %2146 = vmatpush1.bf16.msra.mxu0 0
        %2147 = vmatprep.subr.bf16.mxu0 0
        %2148 = vmatpush1.bf16.msra.mxu0 0
        %2149 = vmatprep.subr.bf16.mxu0 0
        %2150 = vmatpush1.bf16.msra.mxu0 0
        %2151 = vmatprep.subr.bf16.mxu0 0
        %2152 = vmatpush1.bf16.msra.mxu0 0
        %2153 = vmatprep.subr.bf16.mxu0 0
        %2154 = vmatpush1.bf16.msra.mxu0 0
        %2155 = vmatprep.subr.bf16.mxu0 0
        %2156 = vmatpush1.bf16.msra.mxu0 %v2139
        %2157 = vmatprep.subr.bf16.mxu0 0
        %2158 = vmatpush2.bf16.msra.mxu0 0
        %2159 = vmatprep.subr.bf16.mxu0 0
        %2160 = vmatpush2.bf16.msra.mxu0 0
        %2161 = vmatprep.subr.bf16.mxu0 0
        %2162 = vmatpush2.bf16.msra.mxu0 0
        %2163 = vmatprep.subr.bf16.mxu0 0
        %2164 = vmatpush2.bf16.msra.mxu0 0
        %2165 = vmatprep.subr.bf16.mxu0 0
        %2166 = vmatpush2.bf16.msra.mxu0 0
        %2167 = vmatprep.subr.bf16.mxu0 0
        %2168 = vmatpush2.bf16.msra.mxu0 0
        %2169 = vmatprep.subr.bf16.mxu0 0
        %2170 = vmatpush2.bf16.msra.mxu0 0
        %2171 = vmatprep.subr.bf16.mxu0 0
        %2172 = vmatpush2.bf16.msra.mxu0 0
        %2173 = vmatprep.mubr.bf16.mxu0 0
        %2174 = vmatmul.mubr.bf16.gmra.mxu0 %v2136
        %v2175 = vpop.f32.mrf.mxu0
        %v2176 = vadd.f32 0.0, %v2175
        %v2177 = vpop.f32.mrf.mxu0
        %v2178 = vpop.f32.mrf.mxu0
        %v2179 = vpop.f32.mrf.mxu0
        %2180 = vdwg.mxu0
        %v2182 = vsel %vm1983, %v2074, 0
        %v2185 = vsel %vm2091, %v2082, 0
        %2187 = vmatprep.subr.bf16.mxu0 0
        %2188 = vmatpush1.bf16.msra.mxu0 0
        %2189 = vmatprep.subr.bf16.mxu0 0
        %2190 = vmatpush1.bf16.msra.mxu0 0
        %2191 = vmatprep.subr.bf16.mxu0 0
        %2192 = vmatpush1.bf16.msra.mxu0 0
        %2193 = vmatprep.subr.bf16.mxu0 0
        %2194 = vmatpush1.bf16.msra.mxu0 0
        %2195 = vmatprep.subr.bf16.mxu0 0
        %2196 = vmatpush1.bf16.msra.mxu0 0
        %2197 = vmatprep.subr.bf16.mxu0 0
        %2198 = vmatpush1.bf16.msra.mxu0 0
        %2199 = vmatprep.subr.bf16.mxu0 0
        %2200 = vmatpush1.bf16.msra.mxu0 0
        %2201 = vmatprep.subr.bf16.mxu0 0
        %2202 = vmatpush1.bf16.msra.mxu0 %v2185
        %2203 = vmatprep.subr.bf16.mxu0 0
        %2204 = vmatpush2.bf16.msra.mxu0 0
        %2205 = vmatprep.subr.bf16.mxu0 0
        %2206 = vmatpush2.bf16.msra.mxu0 0
        %2207 = vmatprep.subr.bf16.mxu0 0
        %2208 = vmatpush2.bf16.msra.mxu0 0
        %2209 = vmatprep.subr.bf16.mxu0 0
        %2210 = vmatpush2.bf16.msra.mxu0 0
        %2211 = vmatprep.subr.bf16.mxu0 0
        %2212 = vmatpush2.bf16.msra.mxu0 0
        %2213 = vmatprep.subr.bf16.mxu0 0
        %2214 = vmatpush2.bf16.msra.mxu0 0
        %2215 = vmatprep.subr.bf16.mxu0 0
        %2216 = vmatpush2.bf16.msra.mxu0 0
        %2217 = vmatprep.subr.bf16.mxu0 0
        %2218 = vmatpush2.bf16.msra.mxu0 0
        %2219 = vmatprep.mubr.bf16.mxu0 0
        %2220 = vmatmul.mubr.bf16.gmra.mxu0 %v2182
        %v2221 = vpop.f32.mrf.mxu0
        %v2222 = vadd.f32 0.0, %v2221
        %v2223 = vpop.f32.mrf.mxu0
        %v2224 = vpop.f32.mrf.mxu0
        %v2225 = vpop.f32.mrf.mxu0
        %2226 = vdwg.mxu0
        %v2228 = vsel %vm1983, %v2075, 0
        %v2231 = vsel %vm2091, %v2083, 0
        %2233 = vmatprep.subr.bf16.mxu0 0
        %2234 = vmatpush1.bf16.msra.mxu0 0
        %2235 = vmatprep.subr.bf16.mxu0 0
        %2236 = vmatpush1.bf16.msra.mxu0 0
        %2237 = vmatprep.subr.bf16.mxu0 0
        %2238 = vmatpush1.bf16.msra.mxu0 0
        %2239 = vmatprep.subr.bf16.mxu0 0
        %2240 = vmatpush1.bf16.msra.mxu0 0
        %2241 = vmatprep.subr.bf16.mxu0 0
        %2242 = vmatpush1.bf16.msra.mxu0 0
        %2243 = vmatprep.subr.bf16.mxu0 0
        %2244 = vmatpush1.bf16.msra.mxu0 0
        %2245 = vmatprep.subr.bf16.mxu0 0
        %2246 = vmatpush1.bf16.msra.mxu0 0
        %2247 = vmatprep.subr.bf16.mxu0 0
        %2248 = vmatpush1.bf16.msra.mxu0 %v2231
        %2249 = vmatprep.subr.bf16.mxu0 0
        %2250 = vmatpush2.bf16.msra.mxu0 0
        %2251 = vmatprep.subr.bf16.mxu0 0
        %2252 = vmatpush2.bf16.msra.mxu0 0
        %2253 = vmatprep.subr.bf16.mxu0 0
        %2254 = vmatpush2.bf16.msra.mxu0 0
        %2255 = vmatprep.subr.bf16.mxu0 0
        %2256 = vmatpush2.bf16.msra.mxu0 0
        %2257 = vmatprep.subr.bf16.mxu0 0
        %2258 = vmatpush2.bf16.msra.mxu0 0
        %2259 = vmatprep.subr.bf16.mxu0 0
        %2260 = vmatpush2.bf16.msra.mxu0 0
        %2261 = vmatprep.subr.bf16.mxu0 0
        %2262 = vmatpush2.bf16.msra.mxu0 0
        %2263 = vmatprep.subr.bf16.mxu0 0
        %2264 = vmatpush2.bf16.msra.mxu0 0
        %2265 = vmatprep.mubr.bf16.mxu0 0
        %2266 = vmatmul.mubr.bf16.gmra.mxu0 %v2228
        %v2267 = vpop.f32.mrf.mxu0
        %v2268 = vadd.f32 0.0, %v2267
        %v2269 = vpop.f32.mrf.mxu0
        %v2270 = vpop.f32.mrf.mxu0
        %v2271 = vpop.f32.mrf.mxu0
        %2272 = vdwg.mxu0
        %v2274 = vsel %vm1983, %v2076, 0
        %v2277 = vsel %vm2091, %v2084, 0
        %2279 = vmatprep.subr.bf16.mxu0 0
        %2280 = vmatpush1.bf16.msra.mxu0 0
        %2281 = vmatprep.subr.bf16.mxu0 0
        %2282 = vmatpush1.bf16.msra.mxu0 0
        %2283 = vmatprep.subr.bf16.mxu0 0
        %2284 = vmatpush1.bf16.msra.mxu0 0
        %2285 = vmatprep.subr.bf16.mxu0 0
        %2286 = vmatpush1.bf16.msra.mxu0 0
        %2287 = vmatprep.subr.bf16.mxu0 0
        %2288 = vmatpush1.bf16.msra.mxu0 0
        %2289 = vmatprep.subr.bf16.mxu0 0
        %2290 = vmatpush1.bf16.msra.mxu0 0
        %2291 = vmatprep.subr.bf16.mxu0 0
        %2292 = vmatpush1.bf16.msra.mxu0 0
        %2293 = vmatprep.subr.bf16.mxu0 0
        %2294 = vmatpush1.bf16.msra.mxu0 %v2277
        %2295 = vmatprep.subr.bf16.mxu0 0
        %2296 = vmatpush2.bf16.msra.mxu0 0
        %2297 = vmatprep.subr.bf16.mxu0 0
        %2298 = vmatpush2.bf16.msra.mxu0 0
        %2299 = vmatprep.subr.bf16.mxu0 0
        %2300 = vmatpush2.bf16.msra.mxu0 0
        %2301 = vmatprep.subr.bf16.mxu0 0
        %2302 = vmatpush2.bf16.msra.mxu0 0
        %2303 = vmatprep.subr.bf16.mxu0 0
        %2304 = vmatpush2.bf16.msra.mxu0 0
        %2305 = vmatprep.subr.bf16.mxu0 0
        %2306 = vmatpush2.bf16.msra.mxu0 0
        %2307 = vmatprep.subr.bf16.mxu0 0
        %2308 = vmatpush2.bf16.msra.mxu0 0
        %2309 = vmatprep.subr.bf16.mxu0 0
        %2310 = vmatpush2.bf16.msra.mxu0 0
        %2311 = vmatprep.mubr.bf16.mxu0 0
        %2312 = vmatmul.mubr.bf16.gmra.mxu0 %v2274
        %v2313 = vpop.f32.mrf.mxu0
        %v2314 = vadd.f32 0.0, %v2313
        %v2315 = vpop.f32.mrf.mxu0
        %v2316 = vpop.f32.mrf.mxu0
        %v2317 = vpop.f32.mrf.mxu0
        %2318 = vdwg.mxu0
        %v2320 = vsel %vm1983, %v2077, 0
        %v2323 = vsel %vm2091, %v2085, 0
        %2325 = vmatprep.subr.bf16.mxu0 0
        %2326 = vmatpush1.bf16.msra.mxu0 0
        %2327 = vmatprep.subr.bf16.mxu0 0
        %2328 = vmatpush1.bf16.msra.mxu0 0
        %2329 = vmatprep.subr.bf16.mxu0 0
        %2330 = vmatpush1.bf16.msra.mxu0 0
        %2331 = vmatprep.subr.bf16.mxu0 0
        %2332 = vmatpush1.bf16.msra.mxu0 0
        %2333 = vmatprep.subr.bf16.mxu0 0
        %2334 = vmatpush1.bf16.msra.mxu0 0
        %2335 = vmatprep.subr.bf16.mxu0 0
        %2336 = vmatpush1.bf16.msra.mxu0 0
        %2337 = vmatprep.subr.bf16.mxu0 0
        %2338 = vmatpush1.bf16.msra.mxu0 0
        %2339 = vmatprep.subr.bf16.mxu0 0
        %2340 = vmatpush1.bf16.msra.mxu0 %v2323
        %2341 = vmatprep.subr.bf16.mxu0 0
        %2342 = vmatpush2.bf16.msra.mxu0 0
        %2343 = vmatprep.subr.bf16.mxu0 0
        %2344 = vmatpush2.bf16.msra.mxu0 0
        %2345 = vmatprep.subr.bf16.mxu0 0
        %2346 = vmatpush2.bf16.msra.mxu0 0
        %2347 = vmatprep.subr.bf16.mxu0 0
        %2348 = vmatpush2.bf16.msra.mxu0 0
        %2349 = vmatprep.subr.bf16.mxu0 0
        %2350 = vmatpush2.bf16.msra.mxu0 0
        %2351 = vmatprep.subr.bf16.mxu0 0
        %2352 = vmatpush2.bf16.msra.mxu0 0
        %2353 = vmatprep.subr.bf16.mxu0 0
        %2354 = vmatpush2.bf16.msra.mxu0 0
        %2355 = vmatprep.subr.bf16.mxu0 0
        %2356 = vmatpush2.bf16.msra.mxu0 0
        %2357 = vmatprep.mubr.bf16.mxu0 0
        %2358 = vmatmul.mubr.bf16.gmra.mxu0 %v2320
        %v2359 = vpop.f32.mrf.mxu0
        %v2360 = vadd.f32 0.0, %v2359
        %v2361 = vpop.f32.mrf.mxu0
        %v2362 = vpop.f32.mrf.mxu0
        %v2363 = vpop.f32.mrf.mxu0
        %2364 = vdwg.mxu0
        %v2366 = vsel %vm1983, %v2078, 0
        %v2369 = vsel %vm2091, %v2086, 0
        %2371 = vmatprep.subr.bf16.mxu0 0
        %2372 = vmatpush1.bf16.msra.mxu0 0
        %2373 = vmatprep.subr.bf16.mxu0 0
        %2374 = vmatpush1.bf16.msra.mxu0 0
        %2375 = vmatprep.subr.bf16.mxu0 0
        %2376 = vmatpush1.bf16.msra.mxu0 0
        %2377 = vmatprep.subr.bf16.mxu0 0
        %2378 = vmatpush1.bf16.msra.mxu0 0
        %2379 = vmatprep.subr.bf16.mxu0 0
        %2380 = vmatpush1.bf16.msra.mxu0 0
        %2381 = vmatprep.subr.bf16.mxu0 0
        %2382 = vmatpush1.bf16.msra.mxu0 0
        %2383 = vmatprep.subr.bf16.mxu0 0
        %2384 = vmatpush1.bf16.msra.mxu0 0
        %2385 = vmatprep.subr.bf16.mxu0 0
        %2386 = vmatpush1.bf16.msra.mxu0 %v2369
        %2387 = vmatprep.subr.bf16.mxu0 0
        %2388 = vmatpush2.bf16.msra.mxu0 0
        %2389 = vmatprep.subr.bf16.mxu0 0
        %2390 = vmatpush2.bf16.msra.mxu0 0
        %2391 = vmatprep.subr.bf16.mxu0 0
        %2392 = vmatpush2.bf16.msra.mxu0 0
        %2393 = vmatprep.subr.bf16.mxu0 0
        %2394 = vmatpush2.bf16.msra.mxu0 0
        %2395 = vmatprep.subr.bf16.mxu0 0
        %2396 = vmatpush2.bf16.msra.mxu0 0
        %2397 = vmatprep.subr.bf16.mxu0 0
        %2398 = vmatpush2.bf16.msra.mxu0 0
        %2399 = vmatprep.subr.bf16.mxu0 0
        %2400 = vmatpush2.bf16.msra.mxu0 0
        %2401 = vmatprep.subr.bf16.mxu0 0
        %2402 = vmatpush2.bf16.msra.mxu0 0
        %2403 = vmatprep.mubr.bf16.mxu0 0
        %2404 = vmatmul.mubr.bf16.gmra.mxu0 %v2366
        %v2405 = vpop.f32.mrf.mxu0
        %v2406 = vadd.f32 0.0, %v2405
        %v2407 = vpop.f32.mrf.mxu0
        %v2408 = vpop.f32.mrf.mxu0
        %v2409 = vpop.f32.mrf.mxu0
        %2410 = vdwg.mxu0
        %v2412 = vsel %vm1983, %v2079, 0
        %v2415 = vsel %vm2091, %v2087, 0
        %2417 = vmatprep.subr.bf16.mxu0 0
        %2418 = vmatpush1.bf16.msra.mxu0 0
        %2419 = vmatprep.subr.bf16.mxu0 0
        %2420 = vmatpush1.bf16.msra.mxu0 0
        %2421 = vmatprep.subr.bf16.mxu0 0
        %2422 = vmatpush1.bf16.msra.mxu0 0
        %2423 = vmatprep.subr.bf16.mxu0 0
        %2424 = vmatpush1.bf16.msra.mxu0 0
        %2425 = vmatprep.subr.bf16.mxu0 0
        %2426 = vmatpush1.bf16.msra.mxu0 0
        %2427 = vmatprep.subr.bf16.mxu0 0
        %2428 = vmatpush1.bf16.msra.mxu0 0
        %2429 = vmatprep.subr.bf16.mxu0 0
        %2430 = vmatpush1.bf16.msra.mxu0 0
        %2431 = vmatprep.subr.bf16.mxu0 0
        %2432 = vmatpush1.bf16.msra.mxu0 %v2415
        %2433 = vmatprep.subr.bf16.mxu0 0
        %2434 = vmatpush2.bf16.msra.mxu0 0
        %2435 = vmatprep.subr.bf16.mxu0 0
        %2436 = vmatpush2.bf16.msra.mxu0 0
        %2437 = vmatprep.subr.bf16.mxu0 0
        %2438 = vmatpush2.bf16.msra.mxu0 0
        %2439 = vmatprep.subr.bf16.mxu0 0
        %2440 = vmatpush2.bf16.msra.mxu0 0
        %2441 = vmatprep.subr.bf16.mxu0 0
        %2442 = vmatpush2.bf16.msra.mxu0 0
        %2443 = vmatprep.subr.bf16.mxu0 0
        %2444 = vmatpush2.bf16.msra.mxu0 0
        %2445 = vmatprep.subr.bf16.mxu0 0
        %2446 = vmatpush2.bf16.msra.mxu0 0
        %2447 = vmatprep.subr.bf16.mxu0 0
        %2448 = vmatpush2.bf16.msra.mxu0 0
        %2449 = vmatprep.mubr.bf16.mxu0 0
        %2450 = vmatmul.mubr.bf16.gmra.mxu0 %v2412
        %v2451 = vpop.f32.mrf.mxu0
        %v2452 = vadd.f32 0.0, %v2451
        %v2453 = vpop.f32.mrf.mxu0
        %v2454 = vpop.f32.mrf.mxu0
        %v2455 = vpop.f32.mrf.mxu0
        %2456 = vdwg.mxu0
        %v2457 = vpack.c.bf16 %v2130, %v2130
        %v2458 = vpack.c.bf16 %v2176, %v2176
        %v2459 = vpack.c.bf16 %v2222, %v2222
        %v2460 = vpack.c.bf16 %v2268, %v2268
        %v2461 = vpack.c.bf16 %v2314, %v2314
        %v2462 = vpack.c.bf16 %v2360, %v2360
        %v2463 = vpack.c.bf16 %v2406, %v2406
        %v2464 = vpack.c.bf16 %v2452, %v2452
        %v2465 = vld [vmem:[%s4] sm:$0xf]
        %v2466 = vld [vmem:[%s4 + $0x4] sm:$0xf]
        %v2467 = vld [vmem:[%s4 + $0x8] sm:$0xf]
        %v2468 = vld [vmem:[%s4 + $0xc] sm:$0xf]
        %v2469 = vld [vmem:[%s4 + $0x10] sm:$0xf]
        %v2470 = vld [vmem:[%s4 + $0x14] sm:$0xf]
        %v2471 = vld [vmem:[%s4 + $0x18] sm:$0xf]
        %v2472 = vld [vmem:[%s4 + $0x1c] sm:$0xf]
        %v2473 = vld [vmem:[%s4 + $0x20] sm:$0xf]
        %v2474 = vld [vmem:[%s4 + $0x24] sm:$0xf]
        %v2475 = vld [vmem:[%s4 + $0x28] sm:$0xf]
        %v2476 = vld [vmem:[%s4 + $0x2c] sm:$0xf]
        %v2477 = vld [vmem:[%s4 + $0x30] sm:$0xf]
        %v2478 = vld [vmem:[%s4 + $0x34] sm:$0xf]
        %v2479 = vld [vmem:[%s4 + $0x38] sm:$0xf]
        %v2480 = vld [vmem:[%s4 + $0x3c] sm:$0xf]
        %v2481 = vld [vmem:[%s4 + $0x40] sm:$0xf]
        %v2482 = vld [vmem:[%s4 + $0x44] sm:$0xf]
        %v2483 = vld [vmem:[%s4 + $0x48] sm:$0xf]
        %v2484 = vld [vmem:[%s4 + $0x4c] sm:$0xf]
        %v2485 = vld [vmem:[%s4 + $0x50] sm:$0xf]
        %v2486 = vld [vmem:[%s4 + $0x54] sm:$0xf]
        %v2487 = vld [vmem:[%s4 + $0x58] sm:$0xf]
        %v2488 = vld [vmem:[%s4 + $0x5c] sm:$0xf]
        %v2489 = vld [vmem:[%s4 + $0x60] sm:$0xf]
        %v2490 = vld [vmem:[%s4 + $0x64] sm:$0xf]
        %v2491 = vld [vmem:[%s4 + $0x68] sm:$0xf]
        %v2492 = vld [vmem:[%s4 + $0x6c] sm:$0xf]
        %v2493 = vld [vmem:[%s4 + $0x70] sm:$0xf]
        %v2494 = vld [vmem:[%s4 + $0x74] sm:$0xf]
        %v2495 = vld [vmem:[%s4 + $0x78] sm:$0xf]
        %v2496 = vld [vmem:[%s4 + $0x7c] sm:$0xf]
        %v2497 = vld [vmem:[%s4 + $0x80] sm:$0xf]
        %v2498 = vld [vmem:[%s4 + $0x84] sm:$0xf]
        %v2499 = vld [vmem:[%s4 + $0x88] sm:$0xf]
        %v2500 = vld [vmem:[%s4 + $0x8c] sm:$0xf]
        %v2501 = vld [vmem:[%s4 + $0x90] sm:$0xf]
        %v2502 = vld [vmem:[%s4 + $0x94] sm:$0xf]
        %v2503 = vld [vmem:[%s4 + $0x98] sm:$0xf]
        %v2504 = vld [vmem:[%s4 + $0x9c] sm:$0xf]
        %v2505 = vld [vmem:[%s4 + $0xa0] sm:$0xf]
        %v2506 = vld [vmem:[%s4 + $0xa4] sm:$0xf]
        %v2507 = vld [vmem:[%s4 + $0xa8] sm:$0xf]
        %v2508 = vld [vmem:[%s4 + $0xac] sm:$0xf]
        %v2509 = vld [vmem:[%s4 + $0xb0] sm:$0xf]
        %v2510 = vld [vmem:[%s4 + $0xb4] sm:$0xf]
        %v2511 = vld [vmem:[%s4 + $0xb8] sm:$0xf]
        %v2512 = vld [vmem:[%s4 + $0xbc] sm:$0xf]
        %v2513 = vld [vmem:[%s4 + $0xc0] sm:$0xf]
        %v2514 = vld [vmem:[%s4 + $0xc4] sm:$0xf]
        %v2515 = vld [vmem:[%s4 + $0xc8] sm:$0xf]
        %v2516 = vld [vmem:[%s4 + $0xcc] sm:$0xf]
        %v2517 = vld [vmem:[%s4 + $0xd0] sm:$0xf]
        %v2518 = vld [vmem:[%s4 + $0xd4] sm:$0xf]
        %v2519 = vld [vmem:[%s4 + $0xd8] sm:$0xf]
        %v2520 = vld [vmem:[%s4 + $0xdc] sm:$0xf]
        %v2521 = vld [vmem:[%s4 + $0xe0] sm:$0xf]
        %v2522 = vld [vmem:[%s4 + $0xe4] sm:$0xf]
        %v2523 = vld [vmem:[%s4 + $0xe8] sm:$0xf]
        %v2524 = vld [vmem:[%s4 + $0xec] sm:$0xf]
        %v2525 = vld [vmem:[%s4 + $0xf0] sm:$0xf]
        %v2526 = vld [vmem:[%s4 + $0xf4] sm:$0xf]
        %v2527 = vld [vmem:[%s4 + $0xf8] sm:$0xf]
        %v2528 = vld [vmem:[%s4 + $0xfc] sm:$0xf]
        %v2537 = vunpack.c.l.b16 %v2465
        %v2538 = vunpack.c.l.b16 %v2466
        %v2539 = vunpack.c.l.b16 %v2467
        %v2540 = vunpack.c.l.b16 %v2468
        %v2541 = vunpack.c.l.b16 %v2469
        %v2542 = vunpack.c.l.b16 %v2470
        %v2543 = vunpack.c.l.b16 %v2471
        %v2544 = vunpack.c.l.b16 %v2472
        %v2545 = vpack.c.b16 %v2538, %v2537
        %v2546 = vpack.c.b16 %v2540, %v2539
        %v2547 = vpack.c.b16 %v2542, %v2541
        %v2548 = vpack.c.b16 %v2544, %v2543
        %v2554 = vsel %vm1614, %v2457, 0
        %2556 = vmatprep.subr.bf16.mxu0 0
        %2557 = vmatpush1.bf16.msra.mxu0 0
        %2558 = vmatprep.subr.bf16.mxu0 0
        %2559 = vmatpush1.bf16.msra.mxu0 0
        %2560 = vmatprep.subr.bf16.mxu0 0
        %2561 = vmatpush1.bf16.msra.mxu0 0
        %2562 = vmatprep.subr.bf16.mxu0 0
        %2563 = vmatpush1.bf16.msra.mxu0 0
        %2564 = vmatprep.subr.bf16.mxu0 0
        %2565 = vmatpush1.bf16.msra.mxu0 %v2548
        %2566 = vmatprep.subr.bf16.mxu0 0
        %2567 = vmatpush1.bf16.msra.mxu0 %v2547
        %2568 = vmatprep.subr.bf16.mxu0 0
        %2569 = vmatpush1.bf16.msra.mxu0 %v2546
        %2570 = vmatprep.subr.bf16.mxu0 0
        %2571 = vmatpush1.bf16.msra.mxu0 %v2545
        %2572 = vmatprep.subr.bf16.mxu0 0
        %2573 = vmatpush2.bf16.msra.mxu0 0
        %2574 = vmatprep.subr.bf16.mxu0 0
        %2575 = vmatpush2.bf16.msra.mxu0 0
        %2576 = vmatprep.subr.bf16.mxu0 0
        %2577 = vmatpush2.bf16.msra.mxu0 0
        %2578 = vmatprep.subr.bf16.mxu0 0
        %2579 = vmatpush2.bf16.msra.mxu0 0
        %2580 = vmatprep.subr.bf16.mxu0 0
        %2581 = vmatpush2.bf16.msra.mxu0 0
        %2582 = vmatprep.subr.bf16.mxu0 0
        %2583 = vmatpush2.bf16.msra.mxu0 0
        %2584 = vmatprep.subr.bf16.mxu0 0
        %2585 = vmatpush2.bf16.msra.mxu0 0
        %2586 = vmatprep.subr.bf16.mxu0 0
        %2587 = vmatpush2.bf16.msra.mxu0 0
        %2588 = vmatprep.mubr.bf16.mxu0 0
        %2589 = vmatmul.mubr.bf16.gmra.mxu0 %v2554
        %v2590 = vpop.f32.mrf.mxu0
        %v2591 = vadd.f32 0.0, %v2590
        %v2592 = vpop.f32.mrf.mxu0
        %v2593 = vpop.f32.mrf.mxu0
        %v2594 = vpop.f32.mrf.mxu0
        %2595 = vdwg.mxu0
        %v2604 = vunpack.c.l.b16 %v2473
        %v2605 = vunpack.c.l.b16 %v2474
        %v2606 = vunpack.c.l.b16 %v2475
        %v2607 = vunpack.c.l.b16 %v2476
        %v2608 = vunpack.c.l.b16 %v2477
        %v2609 = vunpack.c.l.b16 %v2478
        %v2610 = vunpack.c.l.b16 %v2479
        %v2611 = vunpack.c.l.b16 %v2480
        %v2612 = vpack.c.b16 %v2605, %v2604
        %v2613 = vpack.c.b16 %v2607, %v2606
        %v2614 = vpack.c.b16 %v2609, %v2608
        %v2615 = vpack.c.b16 %v2611, %v2610
        %v2621 = vsel %vm1614, %v2458, 0
        %2623 = vmatprep.subr.bf16.mxu0 0
        %2624 = vmatpush1.bf16.msra.mxu0 0
        %2625 = vmatprep.subr.bf16.mxu0 0
        %2626 = vmatpush1.bf16.msra.mxu0 0
        %2627 = vmatprep.subr.bf16.mxu0 0
        %2628 = vmatpush1.bf16.msra.mxu0 0
        %2629 = vmatprep.subr.bf16.mxu0 0
        %2630 = vmatpush1.bf16.msra.mxu0 0
        %2631 = vmatprep.subr.bf16.mxu0 0
        %2632 = vmatpush1.bf16.msra.mxu0 %v2615
        %2633 = vmatprep.subr.bf16.mxu0 0
        %2634 = vmatpush1.bf16.msra.mxu0 %v2614
        %2635 = vmatprep.subr.bf16.mxu0 0
        %2636 = vmatpush1.bf16.msra.mxu0 %v2613
        %2637 = vmatprep.subr.bf16.mxu0 0
        %2638 = vmatpush1.bf16.msra.mxu0 %v2612
        %2639 = vmatprep.subr.bf16.mxu0 0
        %2640 = vmatpush2.bf16.msra.mxu0 0
        %2641 = vmatprep.subr.bf16.mxu0 0
        %2642 = vmatpush2.bf16.msra.mxu0 0
        %2643 = vmatprep.subr.bf16.mxu0 0
        %2644 = vmatpush2.bf16.msra.mxu0 0
        %2645 = vmatprep.subr.bf16.mxu0 0
        %2646 = vmatpush2.bf16.msra.mxu0 0
        %2647 = vmatprep.subr.bf16.mxu0 0
        %2648 = vmatpush2.bf16.msra.mxu0 0
        %2649 = vmatprep.subr.bf16.mxu0 0
        %2650 = vmatpush2.bf16.msra.mxu0 0
        %2651 = vmatprep.subr.bf16.mxu0 0
        %2652 = vmatpush2.bf16.msra.mxu0 0
        %2653 = vmatprep.subr.bf16.mxu0 0
        %2654 = vmatpush2.bf16.msra.mxu0 0
        %2655 = vmatprep.mubr.bf16.mxu0 0
        %2656 = vmatmul.mubr.bf16.gmra.mxu0 %v2621
        %v2657 = vpop.f32.mrf.mxu0
        %v2658 = vadd.f32 0.0, %v2657
        %v2659 = vpop.f32.mrf.mxu0
        %v2660 = vpop.f32.mrf.mxu0
        %v2661 = vpop.f32.mrf.mxu0
        %2662 = vdwg.mxu0
        %v2671 = vunpack.c.l.b16 %v2481
        %v2672 = vunpack.c.l.b16 %v2482
        %v2673 = vunpack.c.l.b16 %v2483
        %v2674 = vunpack.c.l.b16 %v2484
        %v2675 = vunpack.c.l.b16 %v2485
        %v2676 = vunpack.c.l.b16 %v2486
        %v2677 = vunpack.c.l.b16 %v2487
        %v2678 = vunpack.c.l.b16 %v2488
        %v2679 = vpack.c.b16 %v2672, %v2671
        %v2680 = vpack.c.b16 %v2674, %v2673
        %v2681 = vpack.c.b16 %v2676, %v2675
        %v2682 = vpack.c.b16 %v2678, %v2677
        %v2688 = vsel %vm1614, %v2459, 0
        %2690 = vmatprep.subr.bf16.mxu0 0
        %2691 = vmatpush1.bf16.msra.mxu0 0
        %2692 = vmatprep.subr.bf16.mxu0 0
        %2693 = vmatpush1.bf16.msra.mxu0 0
        %2694 = vmatprep.subr.bf16.mxu0 0
        %2695 = vmatpush1.bf16.msra.mxu0 0
        %2696 = vmatprep.subr.bf16.mxu0 0
        %2697 = vmatpush1.bf16.msra.mxu0 0
        %2698 = vmatprep.subr.bf16.mxu0 0
        %2699 = vmatpush1.bf16.msra.mxu0 %v2682
        %2700 = vmatprep.subr.bf16.mxu0 0
        %2701 = vmatpush1.bf16.msra.mxu0 %v2681
        %2702 = vmatprep.subr.bf16.mxu0 0
        %2703 = vmatpush1.bf16.msra.mxu0 %v2680
        %2704 = vmatprep.subr.bf16.mxu0 0
        %2705 = vmatpush1.bf16.msra.mxu0 %v2679
        %2706 = vmatprep.subr.bf16.mxu0 0
        %2707 = vmatpush2.bf16.msra.mxu0 0
        %2708 = vmatprep.subr.bf16.mxu0 0
        %2709 = vmatpush2.bf16.msra.mxu0 0
        %2710 = vmatprep.subr.bf16.mxu0 0
        %2711 = vmatpush2.bf16.msra.mxu0 0
        %2712 = vmatprep.subr.bf16.mxu0 0
        %2713 = vmatpush2.bf16.msra.mxu0 0
        %2714 = vmatprep.subr.bf16.mxu0 0
        %2715 = vmatpush2.bf16.msra.mxu0 0
        %2716 = vmatprep.subr.bf16.mxu0 0
        %2717 = vmatpush2.bf16.msra.mxu0 0
        %2718 = vmatprep.subr.bf16.mxu0 0
        %2719 = vmatpush2.bf16.msra.mxu0 0
        %2720 = vmatprep.subr.bf16.mxu0 0
        %2721 = vmatpush2.bf16.msra.mxu0 0
        %2722 = vmatprep.mubr.bf16.mxu0 0
        %2723 = vmatmul.mubr.bf16.gmra.mxu0 %v2688
        %v2724 = vpop.f32.mrf.mxu0
        %v2725 = vadd.f32 0.0, %v2724
        %v2726 = vpop.f32.mrf.mxu0
        %v2727 = vpop.f32.mrf.mxu0
        %v2728 = vpop.f32.mrf.mxu0
        %2729 = vdwg.mxu0
        %v2738 = vunpack.c.l.b16 %v2489
        %v2739 = vunpack.c.l.b16 %v2490
        %v2740 = vunpack.c.l.b16 %v2491
        %v2741 = vunpack.c.l.b16 %v2492
        %v2742 = vunpack.c.l.b16 %v2493
        %v2743 = vunpack.c.l.b16 %v2494
        %v2744 = vunpack.c.l.b16 %v2495
        %v2745 = vunpack.c.l.b16 %v2496
        %v2746 = vpack.c.b16 %v2739, %v2738
        %v2747 = vpack.c.b16 %v2741, %v2740
        %v2748 = vpack.c.b16 %v2743, %v2742
        %v2749 = vpack.c.b16 %v2745, %v2744
        %v2755 = vsel %vm1614, %v2460, 0
        %2757 = vmatprep.subr.bf16.mxu0 0
        %2758 = vmatpush1.bf16.msra.mxu0 0
        %2759 = vmatprep.subr.bf16.mxu0 0
        %2760 = vmatpush1.bf16.msra.mxu0 0
        %2761 = vmatprep.subr.bf16.mxu0 0
        %2762 = vmatpush1.bf16.msra.mxu0 0
        %2763 = vmatprep.subr.bf16.mxu0 0
        %2764 = vmatpush1.bf16.msra.mxu0 0
        %2765 = vmatprep.subr.bf16.mxu0 0
        %2766 = vmatpush1.bf16.msra.mxu0 %v2749
        %2767 = vmatprep.subr.bf16.mxu0 0
        %2768 = vmatpush1.bf16.msra.mxu0 %v2748
        %2769 = vmatprep.subr.bf16.mxu0 0
        %2770 = vmatpush1.bf16.msra.mxu0 %v2747
        %2771 = vmatprep.subr.bf16.mxu0 0
        %2772 = vmatpush1.bf16.msra.mxu0 %v2746
        %2773 = vmatprep.subr.bf16.mxu0 0
        %2774 = vmatpush2.bf16.msra.mxu0 0
        %2775 = vmatprep.subr.bf16.mxu0 0
        %2776 = vmatpush2.bf16.msra.mxu0 0
        %2777 = vmatprep.subr.bf16.mxu0 0
        %2778 = vmatpush2.bf16.msra.mxu0 0
        %2779 = vmatprep.subr.bf16.mxu0 0
        %2780 = vmatpush2.bf16.msra.mxu0 0
        %2781 = vmatprep.subr.bf16.mxu0 0
        %2782 = vmatpush2.bf16.msra.mxu0 0
        %2783 = vmatprep.subr.bf16.mxu0 0
        %2784 = vmatpush2.bf16.msra.mxu0 0
        %2785 = vmatprep.subr.bf16.mxu0 0
        %2786 = vmatpush2.bf16.msra.mxu0 0
        %2787 = vmatprep.subr.bf16.mxu0 0
        %2788 = vmatpush2.bf16.msra.mxu0 0
        %2789 = vmatprep.mubr.bf16.mxu0 0
        %2790 = vmatmul.mubr.bf16.gmra.mxu0 %v2755
        %v2791 = vpop.f32.mrf.mxu0
        %v2792 = vadd.f32 0.0, %v2791
        %v2793 = vpop.f32.mrf.mxu0
        %v2794 = vpop.f32.mrf.mxu0
        %v2795 = vpop.f32.mrf.mxu0
        %2796 = vdwg.mxu0
        %v2805 = vunpack.c.l.b16 %v2497
        %v2806 = vunpack.c.l.b16 %v2498
        %v2807 = vunpack.c.l.b16 %v2499
        %v2808 = vunpack.c.l.b16 %v2500
        %v2809 = vunpack.c.l.b16 %v2501
        %v2810 = vunpack.c.l.b16 %v2502
        %v2811 = vunpack.c.l.b16 %v2503
        %v2812 = vunpack.c.l.b16 %v2504
        %v2813 = vpack.c.b16 %v2806, %v2805
        %v2814 = vpack.c.b16 %v2808, %v2807
        %v2815 = vpack.c.b16 %v2810, %v2809
        %v2816 = vpack.c.b16 %v2812, %v2811
        %v2822 = vsel %vm1614, %v2461, 0
        %2824 = vmatprep.subr.bf16.mxu0 0
        %2825 = vmatpush1.bf16.msra.mxu0 0
        %2826 = vmatprep.subr.bf16.mxu0 0
        %2827 = vmatpush1.bf16.msra.mxu0 0
        %2828 = vmatprep.subr.bf16.mxu0 0
        %2829 = vmatpush1.bf16.msra.mxu0 0
        %2830 = vmatprep.subr.bf16.mxu0 0
        %2831 = vmatpush1.bf16.msra.mxu0 0
        %2832 = vmatprep.subr.bf16.mxu0 0
        %2833 = vmatpush1.bf16.msra.mxu0 %v2816
        %2834 = vmatprep.subr.bf16.mxu0 0
        %2835 = vmatpush1.bf16.msra.mxu0 %v2815
        %2836 = vmatprep.subr.bf16.mxu0 0
        %2837 = vmatpush1.bf16.msra.mxu0 %v2814
        %2838 = vmatprep.subr.bf16.mxu0 0
        %2839 = vmatpush1.bf16.msra.mxu0 %v2813
        %2840 = vmatprep.subr.bf16.mxu0 0
        %2841 = vmatpush2.bf16.msra.mxu0 0
        %2842 = vmatprep.subr.bf16.mxu0 0
        %2843 = vmatpush2.bf16.msra.mxu0 0
        %2844 = vmatprep.subr.bf16.mxu0 0
        %2845 = vmatpush2.bf16.msra.mxu0 0
        %2846 = vmatprep.subr.bf16.mxu0 0
        %2847 = vmatpush2.bf16.msra.mxu0 0
        %2848 = vmatprep.subr.bf16.mxu0 0
        %2849 = vmatpush2.bf16.msra.mxu0 0
        %2850 = vmatprep.subr.bf16.mxu0 0
        %2851 = vmatpush2.bf16.msra.mxu0 0
        %2852 = vmatprep.subr.bf16.mxu0 0
        %2853 = vmatpush2.bf16.msra.mxu0 0
        %2854 = vmatprep.subr.bf16.mxu0 0
        %2855 = vmatpush2.bf16.msra.mxu0 0
        %2856 = vmatprep.mubr.bf16.mxu0 0
        %2857 = vmatmul.mubr.bf16.gmra.mxu0 %v2822
        %v2858 = vpop.f32.mrf.mxu0
        %v2859 = vadd.f32 0.0, %v2858
        %v2860 = vpop.f32.mrf.mxu0
        %v2861 = vpop.f32.mrf.mxu0
        %v2862 = vpop.f32.mrf.mxu0
        %2863 = vdwg.mxu0
        %v2872 = vunpack.c.l.b16 %v2505
        %v2873 = vunpack.c.l.b16 %v2506
        %v2874 = vunpack.c.l.b16 %v2507
        %v2875 = vunpack.c.l.b16 %v2508
        %v2876 = vunpack.c.l.b16 %v2509
        %v2877 = vunpack.c.l.b16 %v2510
        %v2878 = vunpack.c.l.b16 %v2511
        %v2879 = vunpack.c.l.b16 %v2512
        %v2880 = vpack.c.b16 %v2873, %v2872
        %v2881 = vpack.c.b16 %v2875, %v2874
        %v2882 = vpack.c.b16 %v2877, %v2876
        %v2883 = vpack.c.b16 %v2879, %v2878
        %v2889 = vsel %vm1614, %v2462, 0
        %2891 = vmatprep.subr.bf16.mxu0 0
        %2892 = vmatpush1.bf16.msra.mxu0 0
        %2893 = vmatprep.subr.bf16.mxu0 0
        %2894 = vmatpush1.bf16.msra.mxu0 0
        %2895 = vmatprep.subr.bf16.mxu0 0
        %2896 = vmatpush1.bf16.msra.mxu0 0
        %2897 = vmatprep.subr.bf16.mxu0 0
        %2898 = vmatpush1.bf16.msra.mxu0 0
        %2899 = vmatprep.subr.bf16.mxu0 0
        %2900 = vmatpush1.bf16.msra.mxu0 %v2883
        %2901 = vmatprep.subr.bf16.mxu0 0
        %2902 = vmatpush1.bf16.msra.mxu0 %v2882
        %2903 = vmatprep.subr.bf16.mxu0 0
        %2904 = vmatpush1.bf16.msra.mxu0 %v2881
        %2905 = vmatprep.subr.bf16.mxu0 0
        %2906 = vmatpush1.bf16.msra.mxu0 %v2880
        %2907 = vmatprep.subr.bf16.mxu0 0
        %2908 = vmatpush2.bf16.msra.mxu0 0
        %2909 = vmatprep.subr.bf16.mxu0 0
        %2910 = vmatpush2.bf16.msra.mxu0 0
        %2911 = vmatprep.subr.bf16.mxu0 0
        %2912 = vmatpush2.bf16.msra.mxu0 0
        %2913 = vmatprep.subr.bf16.mxu0 0
        %2914 = vmatpush2.bf16.msra.mxu0 0
        %2915 = vmatprep.subr.bf16.mxu0 0
        %2916 = vmatpush2.bf16.msra.mxu0 0
        %2917 = vmatprep.subr.bf16.mxu0 0
        %2918 = vmatpush2.bf16.msra.mxu0 0
        %2919 = vmatprep.subr.bf16.mxu0 0
        %2920 = vmatpush2.bf16.msra.mxu0 0
        %2921 = vmatprep.subr.bf16.mxu0 0
        %2922 = vmatpush2.bf16.msra.mxu0 0
        %2923 = vmatprep.mubr.bf16.mxu0 0
        %2924 = vmatmul.mubr.bf16.gmra.mxu0 %v2889
        %v2925 = vpop.f32.mrf.mxu0
        %v2926 = vadd.f32 0.0, %v2925
        %v2927 = vpop.f32.mrf.mxu0
        %v2928 = vpop.f32.mrf.mxu0
        %v2929 = vpop.f32.mrf.mxu0
        %2930 = vdwg.mxu0
        %v2939 = vunpack.c.l.b16 %v2513
        %v2940 = vunpack.c.l.b16 %v2514
        %v2941 = vunpack.c.l.b16 %v2515
        %v2942 = vunpack.c.l.b16 %v2516
        %v2943 = vunpack.c.l.b16 %v2517
        %v2944 = vunpack.c.l.b16 %v2518
        %v2945 = vunpack.c.l.b16 %v2519
        %v2946 = vunpack.c.l.b16 %v2520
        %v2947 = vpack.c.b16 %v2940, %v2939
        %v2948 = vpack.c.b16 %v2942, %v2941
        %v2949 = vpack.c.b16 %v2944, %v2943
        %v2950 = vpack.c.b16 %v2946, %v2945
        %v2956 = vsel %vm1614, %v2463, 0
        %2958 = vmatprep.subr.bf16.mxu0 0
        %2959 = vmatpush1.bf16.msra.mxu0 0
        %2960 = vmatprep.subr.bf16.mxu0 0
        %2961 = vmatpush1.bf16.msra.mxu0 0
        %2962 = vmatprep.subr.bf16.mxu0 0
        %2963 = vmatpush1.bf16.msra.mxu0 0
        %2964 = vmatprep.subr.bf16.mxu0 0
        %2965 = vmatpush1.bf16.msra.mxu0 0
        %2966 = vmatprep.subr.bf16.mxu0 0
        %2967 = vmatpush1.bf16.msra.mxu0 %v2950
        %2968 = vmatprep.subr.bf16.mxu0 0
        %2969 = vmatpush1.bf16.msra.mxu0 %v2949
        %2970 = vmatprep.subr.bf16.mxu0 0
        %2971 = vmatpush1.bf16.msra.mxu0 %v2948
        %2972 = vmatprep.subr.bf16.mxu0 0
        %2973 = vmatpush1.bf16.msra.mxu0 %v2947
        %2974 = vmatprep.subr.bf16.mxu0 0
        %2975 = vmatpush2.bf16.msra.mxu0 0
        %2976 = vmatprep.subr.bf16.mxu0 0
        %2977 = vmatpush2.bf16.msra.mxu0 0
        %2978 = vmatprep.subr.bf16.mxu0 0
        %2979 = vmatpush2.bf16.msra.mxu0 0
        %2980 = vmatprep.subr.bf16.mxu0 0
        %2981 = vmatpush2.bf16.msra.mxu0 0
        %2982 = vmatprep.subr.bf16.mxu0 0
        %2983 = vmatpush2.bf16.msra.mxu0 0
        %2984 = vmatprep.subr.bf16.mxu0 0
        %2985 = vmatpush2.bf16.msra.mxu0 0
        %2986 = vmatprep.subr.bf16.mxu0 0
        %2987 = vmatpush2.bf16.msra.mxu0 0
        %2988 = vmatprep.subr.bf16.mxu0 0
        %2989 = vmatpush2.bf16.msra.mxu0 0
        %2990 = vmatprep.mubr.bf16.mxu0 0
        %2991 = vmatmul.mubr.bf16.gmra.mxu0 %v2956
        %v2992 = vpop.f32.mrf.mxu0
        %v2993 = vadd.f32 0.0, %v2992
        %v2994 = vpop.f32.mrf.mxu0
        %v2995 = vpop.f32.mrf.mxu0
        %v2996 = vpop.f32.mrf.mxu0
        %2997 = vdwg.mxu0
        %v3006 = vunpack.c.l.b16 %v2521
        %v3007 = vunpack.c.l.b16 %v2522
        %v3008 = vunpack.c.l.b16 %v2523
        %v3009 = vunpack.c.l.b16 %v2524
        %v3010 = vunpack.c.l.b16 %v2525
        %v3011 = vunpack.c.l.b16 %v2526
        %v3012 = vunpack.c.l.b16 %v2527
        %v3013 = vunpack.c.l.b16 %v2528
        %v3014 = vpack.c.b16 %v3007, %v3006
        %v3015 = vpack.c.b16 %v3009, %v3008
        %v3016 = vpack.c.b16 %v3011, %v3010
        %v3017 = vpack.c.b16 %v3013, %v3012
        %v3023 = vsel %vm1614, %v2464, 0
        %3025 = vmatprep.subr.bf16.mxu0 0
        %3026 = vmatpush1.bf16.msra.mxu0 0
        %3027 = vmatprep.subr.bf16.mxu0 0
        %3028 = vmatpush1.bf16.msra.mxu0 0
        %3029 = vmatprep.subr.bf16.mxu0 0
        %3030 = vmatpush1.bf16.msra.mxu0 0
        %3031 = vmatprep.subr.bf16.mxu0 0
        %3032 = vmatpush1.bf16.msra.mxu0 0
        %3033 = vmatprep.subr.bf16.mxu0 0
        %3034 = vmatpush1.bf16.msra.mxu0 %v3017
        %3035 = vmatprep.subr.bf16.mxu0 0
        %3036 = vmatpush1.bf16.msra.mxu0 %v3016
        %3037 = vmatprep.subr.bf16.mxu0 0
        %3038 = vmatpush1.bf16.msra.mxu0 %v3015
        %3039 = vmatprep.subr.bf16.mxu0 0
        %3040 = vmatpush1.bf16.msra.mxu0 %v3014
        %3041 = vmatprep.subr.bf16.mxu0 0
        %3042 = vmatpush2.bf16.msra.mxu0 0
        %3043 = vmatprep.subr.bf16.mxu0 0
        %3044 = vmatpush2.bf16.msra.mxu0 0
        %3045 = vmatprep.subr.bf16.mxu0 0
        %3046 = vmatpush2.bf16.msra.mxu0 0
        %3047 = vmatprep.subr.bf16.mxu0 0
        %3048 = vmatpush2.bf16.msra.mxu0 0
        %3049 = vmatprep.subr.bf16.mxu0 0
        %3050 = vmatpush2.bf16.msra.mxu0 0
        %3051 = vmatprep.subr.bf16.mxu0 0
        %3052 = vmatpush2.bf16.msra.mxu0 0
        %3053 = vmatprep.subr.bf16.mxu0 0
        %3054 = vmatpush2.bf16.msra.mxu0 0
        %3055 = vmatprep.subr.bf16.mxu0 0
        %3056 = vmatpush2.bf16.msra.mxu0 0
        %3057 = vmatprep.mubr.bf16.mxu0 0
        %3058 = vmatmul.mubr.bf16.gmra.mxu0 %v3023
        %v3059 = vpop.f32.mrf.mxu0
        %v3060 = vadd.f32 0.0, %v3059
        %v3061 = vpop.f32.mrf.mxu0
        %v3062 = vpop.f32.mrf.mxu0
        %v3063 = vpop.f32.mrf.mxu0
        %3064 = vdwg.mxu0
        %v3065 = vsel %vm294, %v2591, 0.0
        %v3066 = vsel %vm294, %v2658, 0.0
        %v3067 = vadd.f32 %v3065, %v3066
        %v3068 = vsel %vm294, %v2725, 0.0
        %v3069 = vadd.f32 %v3067, %v3068
        %v3070 = vsel %vm294, %v2792, 0.0
        %v3071 = vadd.f32 %v3069, %v3070
        %v3072 = vsel %vm294, %v2859, 0.0
        %v3073 = vadd.f32 %v3071, %v3072
        %v3074 = vsel %vm294, %v2926, 0.0
        %v3075 = vadd.f32 %v3073, %v3074
        %v3076 = vsel %vm294, %v2993, 0.0
        %v3077 = vadd.f32 %v3075, %v3076
        %v3078 = vsel %vm294, %v3060, 0.0
        %v3079 = vadd.f32 %v3077, %v3078
        %v3080 = vld [vmem:[%s5] sm:$0x1]
        %v3082 = vlaneseq
        %v3083 = vshrl.u32 %v3082, 7
        %v3084 = vsub.s32 0, %v3083
        %v3085 = vrot.slane %v3080, %v3084
        %v3087 = vadd.f32 %v3079, %v3085
        %3088 = vst.msk [vmem:[%s242] sm:$0xff] %vm294, %v3087
        %s3089 = sand.u32 %s159, 1
        %s3090 = scalar_lea.sflag [#allocation3], %s3089
        %s3091 = sand.u32 %s159, 1
        %s3092 = smul.addr %s3091, 8
        %s3093 = scalar_lea.vmem [#allocation2], %s3092
        // Predicated region
        $region45: #{_lambda_.1} parent=43 // pred_check
          %p3094 = pneg %p169
        $region46: #{_lambda_.1} parent=43 // pred_check_branch
          %3096 = sbr.rel (%p3094) target = $region48
        $region47: #{_lambda_.1} parent=43 // pred_region
          %s3098 = ssub.s32 128, 128
          %3099 = vsyncadd %s3090, %s3098
          %s3100 = smul.addr %s20, 128
          %s3101 = scalar_lea.hbm %s6, %s3100
          %s3103 = sshll.u32 %s3093, 4
          %s3104 = int_to_ptr.vmem [resolvable:$true] %s3103
          %3106 = dma.vmem_to_hbm [thread:$0]  %s3104, 128, %s3101, %s3090
        $region48: #{_lambda_.1} parent=43 // pred_fallthru
          _
      $region44: #{_lambda_.1} parent=5 // pred_fallthru
        _
      %p3107 = scmp.le.s32.totalorder 2, %s15
      // Predicated region
      $region49: #{_lambda_.1} parent=5 // pred_check
        %p3108 = pneg %p3107
      $region50: #{_lambda_.1} parent=5 // pred_check_branch
        %3110 = sbr.rel (%p3108) target = $region52
      $region51: #{_lambda_.1} parent=5 // pred_region
        %s3111 = ssub.s32 %s15, 2
        // Predicated region
        $region53: #{_lambda_.1} parent=51 // pred_check
          %p3112 = pneg %p175
        $region54: #{_lambda_.1} parent=51 // pred_check_branch
          %3114 = sbr.rel (%p3112) target = $region56
        $region55: #{_lambda_.1} parent=51 // pred_region
          %s3115 = sand.u32 %s160, 1
          %s3116 = scalar_lea.sflag [#allocation3], %s3115
          %s3117 = sand.u32 %s160, 1
          %s3118 = smul.addr %s3117, 8
          %s3119 = scalar_lea.vmem [#allocation2], %s3118
          %3120 = dma.done %s3116, 128
        $region56: #{_lambda_.1} parent=51 // pred_fallthru
          _
      $region52: #{_lambda_.1} parent=5 // pred_fallthru
        _
    $region6: #{_lambda_.1} parent=1 // loop_footer
      %s19 = sadd.s32 1, %s15
    $region7: #{_lambda_.1} parent=1 // loop_footer_branch
      %14 = sbr.rel target = $region3
    $region8: #{_lambda_.1} parent=1 // loop_exit
      _
    %3121 = vsyncpa [#allocation3], 1
    %s3122 = scalar_lea.sflag [#allocation3], 1
    %3123 = vsyncpa %s3122, 1

</llo_original>
